<compile_context>
chip_gen: v6e
topology: v6e:2x2x1
jax: 0.10.0
libtpu: 0.0.40
codegen_flags: <defaults>
</compile_context>

<pallas_src>
import jax
import jax.numpy as jnp
import numpy as np
from jax import lax
from jax.experimental import pallas as pl
from jax.experimental.pallas import tpu as pltpu


def _round_up(n, m):
    return ((n + m - 1) // m) * m


def _make_kernel(k, stride, pad):
    def kernel(x_ref, w_ref, b_ref, o_ref):
        # x_ref : (1, H, W, Cpin)        f32, one batch item, channels on lanes
        # w_ref : (k*k*Cpin, Cpout)      bf16, tap-major im2col weight matrix
        # b_ref : (1, Cpout)             f32 bias
        # o_ref : (1, Ho, Wo, Cpout)     f32
        _, H, W, Cpin = x_ref.shape
        _, Ho, Wo, Cpout = o_ref.shape

        x = x_ref[0]  # (H, W, Cpin)

        # ---- reflection pad, assembled as a value (no scratch store/reload) ----
        if pad > 0:
            rows = ([x[pad - i:pad - i + 1, :, :] for i in range(pad)]        # rows pad..1
                    + [x]
                    + [x[H - 2 - i:H - 1 - i, :, :] for i in range(pad)])     # rows H-2..H-1-pad
            xp = jnp.concatenate(rows, axis=0)                                # (H+2p, W, C)
            cols = ([xp[:, pad - j:pad - j + 1, :] for j in range(pad)]       # cols pad..1
                    + [xp]
                    + [xp[:, W - 2 - j:W - 1 - j, :] for j in range(pad)])    # cols W-2..W-1-pad
            xp = jnp.concatenate(cols, axis=1)                                # (H+2p, W+2p, C)
        else:
            xp = x

        # ---- im2col: one fat (Ho*Wo, k*k*Cpin) @ (k*k*Cpin, Cpout) MXU matmul ----
        taps = []
        for dy in range(k):
            for dx in range(k):
                if stride == 1:
                    t = xp[dy:dy + Ho, dx:dx + Wo, :]
                else:
                    # TODO(synk): stride>1 path uses strided value slices; only
                    # stride=1 is exercised by the test below.
                    t = lax.slice(xp, (dy, dx, 0),
                                  (dy + (Ho - 1) * stride + 1,
                                   dx + (Wo - 1) * stride + 1, Cpin),
                                  (stride, stride, 1))
                taps.append(t.reshape(Ho * Wo, Cpin))
        patch = jnp.concatenate(taps, axis=1).astype(jnp.bfloat16)  # (Ho*Wo, k*k*Cpin)

        acc = jnp.dot(patch, w_ref[...], preferred_element_type=jnp.float32)
        out = acc + b_ref[...]                                      # f32 bias add
        o_ref[0] = out.reshape(Ho, Wo, Cpout)

    return kernel


def conv2d_refpad_pallas(x_nchw, weight, bias=None, *, stride=1):
    """x_nchw: (N, Cin, H, W) f32.  weight: (Cout, Cin, k, k) PyTorch layout.
    bias: (Cout,) or None.  Returns (N, Cout, Ho, Wo) f32 (NCHW)."""
    N, Cin, H, W = x_nchw.shape
    Cout, Cin_w, kh, kw = weight.shape
    assert Cin_w == Cin and kh == kw, "square kernel, matching channels expected"
    k = kh
    pad = k // 2
    assert H > pad and W > pad, "ReflectionPad2d requires pad < spatial dims"
    Ho = (H + 2 * pad - k) // stride + 1
    Wo = (W + 2 * pad - k) // stride + 1

    # Lane-dense channel padding (mainly matters for small channel counts).
    Cpin = _round_up(Cin, 128)
    Cpout = _round_up(Cout, 128)

    # NCHW -> NHWC (channels on lanes), zero-pad channels.
    x = jnp.transpose(x_nchw, (0, 2, 3, 1)).astype(jnp.float32)
    x = jnp.pad(x, ((0, 0), (0, 0), (0, 0), (0, Cpin - Cin)))

    # (Cout, Cin, k, k) -> (k, k, Cin, Cout) -> padded -> (k*k*Cpin, Cpout), bf16.
    w = jnp.transpose(weight, (2, 3, 1, 0)).astype(jnp.float32)
    w = jnp.pad(w, ((0, 0), (0, 0), (0, Cpin - Cin), (0, Cpout - Cout)))
    w = w.reshape(k * k * Cpin, Cpout).astype(jnp.bfloat16)

    if bias is None:
        b = jnp.zeros((1, Cpout), jnp.float32)
    else:
        b = jnp.pad(bias.astype(jnp.float32), (0, Cpout - Cout)).reshape(1, Cpout)

    out = pl.pallas_call(
        _make_kernel(k, stride, pad),
        out_shape=jax.ShapeDtypeStruct((N, Ho, Wo, Cpout), jnp.float32),
        grid_spec=pltpu.PrefetchScalarGridSpec(
            num_scalar_prefetch=0,
            grid=(N,),
            in_specs=[
                pl.BlockSpec((1, H, W, Cpin), lambda n: (n, 0, 0, 0)),
                pl.BlockSpec((k * k * Cpin, Cpout), lambda n: (0, 0)),
                pl.BlockSpec((1, Cpout), lambda n: (0, 0)),
            ],
            out_specs=pl.BlockSpec((1, Ho, Wo, Cpout), lambda n: (n, 0, 0, 0)),
        ),
        compiler_params=pltpu.CompilerParams(
            dimension_semantics=("parallel",),
            vmem_limit_bytes=64 * 1024 * 1024),
    )(x, w, b)

    out = out[:, :, :, :Cout]                       # drop channel padding
    return jnp.transpose(out, (0, 3, 1, 2))         # back to NCHW


# ---------------- pure-JAX reference (verification only) ----------------
def _ref_conv2d_refpad(x, w, b, stride):
    pad = w.shape[-1] // 2
    xp = jnp.pad(x, ((0, 0), (0, 0), (pad, pad), (pad, pad)), mode="reflect")
    y = lax.conv_general_dilated(
        xp, w, window_strides=(stride, stride), padding="VALID",
        dimension_numbers=("NCHW", "OIHW", "NCHW"))
    if b is not None:
        y = y + b.reshape(1, -1, 1, 1)
    return y


if __name__ == "__main__":
    N, Cin, Cout, H, W, K = 2, 4, 8, 16, 16, 3
    key = jax.random.PRNGKey(0)
    kx, kw, kb = jax.random.split(key, 3)

    x = jax.random.normal(kx, (N, Cin, H, W), jnp.float32)
    w = jax.random.normal(kw, (Cout, Cin, K, K), jnp.float32) * 0.1
    b = jax.random.normal(kb, (Cout,), jnp.float32) * 0.1

    out = jax.block_until_ready(conv2d_refpad_pallas(x, w, b, stride=1))
    ref = jax.block_until_ready(_ref_conv2d_refpad(x, w, b, 1))

    # bf16 MXU operands with f32 accumulation -> slightly looser tolerance.
    np.testing.assert_allclose(np.asarray(out), np.asarray(ref),
                               rtol=2e-2, atol=2e-2)
    print("KERNEL_OK")
</pallas_src>

<mosaic_0001>
module attributes {stable_mosaic.version = 11 : i64} {
  func.func @kernel(%arg0: i32, %arg1: memref<1x16x16x128xf32, #tpu.memory_space<vmem>>, %arg2: memref<1152x128xbf16, #tpu.memory_space<vmem>>, %arg3: memref<1x128xf32, #tpu.memory_space<vmem>>, %arg4: memref<1x16x16x128xf32, #tpu.memory_space<vmem>>) attributes {dimension_semantics = [#tpu.dimension_semantics<parallel>], iteration_bounds = array<i64: 2>, scalar_prefetch = 0 : i64, scratch_operands = 0 : i64, tpu.core_type = #tpu.core_type<tc>, window_params = [{transform_indices = @transform_0, window_bounds = array<i64: 1, 16, 16, 128>}, {pipeline_mode = #tpu.pipeline_mode<synchronous>, transform_indices = @transform_1, window_bounds = array<i64: 1152, 128>}, {pipeline_mode = #tpu.pipeline_mode<synchronous>, transform_indices = @transform_2, window_bounds = array<i64: 1, 128>}, {transform_indices = @transform_3, window_bounds = array<i64: 1, 16, 16, 128>}]} {
    %c0 = arith.constant 0 : index
    %c0_0 = arith.constant 0 : index
    %c0_1 = arith.constant 0 : index
    %c0_2 = arith.constant 0 : index
    %0 = vector.load %arg1[%c0, %c0_0, %c0_1, %c0_2] : memref<1x16x16x128xf32, #tpu.memory_space<vmem>>, vector<1x16x16x128xf32>
    %1 = vector.shape_cast %0 : vector<1x16x16x128xf32> to vector<16x16x128xf32>
    %2 = vector.extract_strided_slice %1 {offsets = [1, 0, 0], sizes = [1, 16, 128], strides = [1, 1, 1]} : vector<16x16x128xf32> to vector<1x16x128xf32>
    %3 = vector.extract_strided_slice %1 {offsets = [14, 0, 0], sizes = [1, 16, 128], strides = [1, 1, 1]} : vector<16x16x128xf32> to vector<1x16x128xf32>
    %4 = tpu.concatenate %2, %1, %3 in 0 : vector<1x16x128xf32>, vector<16x16x128xf32>, vector<1x16x128xf32> -> vector<18x16x128xf32>
    %5 = vector.extract_strided_slice %4 {offsets = [0, 1, 0], sizes = [18, 1, 128], strides = [1, 1, 1]} : vector<18x16x128xf32> to vector<18x1x128xf32>
    %6 = vector.extract_strided_slice %4 {offsets = [0, 14, 0], sizes = [18, 1, 128], strides = [1, 1, 1]} : vector<18x16x128xf32> to vector<18x1x128xf32>
    %7 = tpu.concatenate %5, %4, %6 in 1 : vector<18x1x128xf32>, vector<18x16x128xf32>, vector<18x1x128xf32> -> vector<18x18x128xf32>
    %8 = vector.extract_strided_slice %7 {offsets = [0, 0, 0], sizes = [16, 16, 128], strides = [1, 1, 1]} : vector<18x18x128xf32> to vector<16x16x128xf32>
    %9 = vector.shape_cast %8 : vector<16x16x128xf32> to vector<256x128xf32>
    %10 = vector.extract_strided_slice %7 {offsets = [0, 1, 0], sizes = [16, 16, 128], strides = [1, 1, 1]} : vector<18x18x128xf32> to vector<16x16x128xf32>
    %11 = vector.shape_cast %10 : vector<16x16x128xf32> to vector<256x128xf32>
    %12 = vector.extract_strided_slice %7 {offsets = [0, 2, 0], sizes = [16, 16, 128], strides = [1, 1, 1]} : vector<18x18x128xf32> to vector<16x16x128xf32>
    %13 = vector.shape_cast %12 : vector<16x16x128xf32> to vector<256x128xf32>
    %14 = vector.extract_strided_slice %7 {offsets = [1, 0, 0], sizes = [16, 16, 128], strides = [1, 1, 1]} : vector<18x18x128xf32> to vector<16x16x128xf32>
    %15 = vector.shape_cast %14 : vector<16x16x128xf32> to vector<256x128xf32>
    %16 = vector.extract_strided_slice %7 {offsets = [1, 1, 0], sizes = [16, 16, 128], strides = [1, 1, 1]} : vector<18x18x128xf32> to vector<16x16x128xf32>
    %17 = vector.shape_cast %16 : vector<16x16x128xf32> to vector<256x128xf32>
    %18 = vector.extract_strided_slice %7 {offsets = [1, 2, 0], sizes = [16, 16, 128], strides = [1, 1, 1]} : vector<18x18x128xf32> to vector<16x16x128xf32>
    %19 = vector.shape_cast %18 : vector<16x16x128xf32> to vector<256x128xf32>
    %20 = vector.extract_strided_slice %7 {offsets = [2, 0, 0], sizes = [16, 16, 128], strides = [1, 1, 1]} : vector<18x18x128xf32> to vector<16x16x128xf32>
    %21 = vector.shape_cast %20 : vector<16x16x128xf32> to vector<256x128xf32>
    %22 = vector.extract_strided_slice %7 {offsets = [2, 1, 0], sizes = [16, 16, 128], strides = [1, 1, 1]} : vector<18x18x128xf32> to vector<16x16x128xf32>
    %23 = vector.shape_cast %22 : vector<16x16x128xf32> to vector<256x128xf32>
    %24 = vector.extract_strided_slice %7 {offsets = [2, 2, 0], sizes = [16, 16, 128], strides = [1, 1, 1]} : vector<18x18x128xf32> to vector<16x16x128xf32>
    %25 = vector.shape_cast %24 : vector<16x16x128xf32> to vector<256x128xf32>
    %26 = tpu.concatenate %9, %11, %13, %15, %17, %19, %21, %23, %25 in 1 : vector<256x128xf32>, vector<256x128xf32>, vector<256x128xf32>, vector<256x128xf32>, vector<256x128xf32>, vector<256x128xf32>, vector<256x128xf32>, vector<256x128xf32>, vector<256x128xf32> -> vector<256x1152xf32>
    %27 = arith.truncf %26 : vector<256x1152xf32> to vector<256x1152xbf16>
    %c0_3 = arith.constant 0 : index
    %c0_4 = arith.constant 0 : index
    %28 = vector.load %arg2[%c0_3, %c0_4] : memref<1152x128xbf16, #tpu.memory_space<vmem>>, vector<1152x128xbf16>
    %cst = arith.constant dense<0.000000e+00> : vector<256x128xf32>
    %29 = tpu.matmul %27, %28, %cst {dimension_numbers = #tpu.dot_dimension_numbers<[1], [0], [0], [1], [0, 0, 1, 1], [], []>} : vector<256x1152xbf16>, vector<1152x128xbf16>, vector<256x128xf32> -> vector<256x128xf32>
    %c0_5 = arith.constant 0 : index
    %c0_6 = arith.constant 0 : index
    %30 = vector.load %arg3[%c0_5, %c0_6] : memref<1x128xf32, #tpu.memory_space<vmem>>, vector<1x128xf32>
    %31 = vector.broadcast %30 : vector<1x128xf32> to vector<256x128xf32>
    %32 = arith.addf %29, %31 : vector<256x128xf32>
    %33 = vector.shape_cast %32 : vector<256x128xf32> to vector<16x16x128xf32>
    %c0_7 = arith.constant 0 : index
    %c0_8 = arith.constant 0 : index
    %c0_9 = arith.constant 0 : index
    %c0_10 = arith.constant 0 : index
    %34 = vector.load %arg4[%c0_7, %c0_8, %c0_9, %c0_10] : memref<1x16x16x128xf32, #tpu.memory_space<vmem>>, vector<1x16x16x128xf32>
    %35 = vector.shape_cast %34 : vector<1x16x16x128xf32> to vector<16x16x128xf32>
    %36 = vector.shape_cast %33 : vector<16x16x128xf32> to vector<1x16x16x128xf32>
    tpu.vector_store %arg4[%c0_7, %c0_8, %c0_9, %c0_10], %36 {strides = array<i32>} : memref<1x16x16x128xf32, #tpu.memory_space<vmem>>, vector<1x16x16x128xf32>,
    return
  }
  func.func @transform_0(%arg0: i32) -> (i32, i32, i32, i32) {
    %c0_i32 = arith.constant 0 : i32
    %c0_i32_0 = arith.constant 0 : i32
    %c0_i32_1 = arith.constant 0 : i32
    %c0_i32_2 = arith.constant 0 : i32
    return %arg0, %c0_i32, %c0_i32_0, %c0_i32_1 : i32, i32, i32, i32
  }
  func.func @transform_1(%arg0: i32) -> (i32, i32) {
    %c0_i32 = arith.constant 0 : i32
    %c0_i32_0 = arith.constant 0 : i32
    %c0_i32_1 = arith.constant 0 : i32
    return %c0_i32, %c0_i32_0 : i32, i32
  }
  func.func @transform_2(%arg0: i32) -> (i32, i32) {
    %c0_i32 = arith.constant 0 : i32
    %c0_i32_0 = arith.constant 0 : i32
    %c0_i32_1 = arith.constant 0 : i32
    return %c0_i32, %c0_i32_0 : i32, i32
  }
  func.func @transform_3(%arg0: i32) -> (i32, i32, i32, i32) {
    %c0_i32 = arith.constant 0 : i32
    %c0_i32_0 = arith.constant 0 : i32
    %c0_i32_1 = arith.constant 0 : i32
    %c0_i32_2 = arith.constant 0 : i32
    return %arg0, %c0_i32, %c0_i32_0, %c0_i32_1 : i32, i32, i32, i32
  }
}

</mosaic_0001>

<llo_original>
// kernel: tpu_custom_call.1
$region0: #{tpu_custom_call.1}
  #allocation0 [shape = 'u32[]', space=smem, size = 0x4, offset = 0x4, fixed_abs, tag = 'smem constant byte address 0x4 - core index']
  #allocation1 [shape = 'u32[144,128]{1,0:T(1,128)}', space=vmem, size = 0x12000, scoped, tag = 'internal scratch']
  %s0 = inlined_call_operand.hbm [shape: f32[2,16,16,128], index: 0, kind: input, shape index: {}]
  %s1 = inlined_call_operand.hbm [shape: bf16[1152,128], index: 1, kind: input, shape index: {}]
  %s2 = inlined_call_operand.vmem [shape: f32[1,128], index: 2, kind: input, shape index: {}]
  %s3 = inlined_call_operand.hbm [shape: f32[2,16,16,128], index: 3, kind: output, shape index: {}]
  %s4 = sld [smem:[#allocation0]]
  $region53: #{tpu_custom_call.1} parent=0
    _
  %s6 = ssub.s32 1, %s4
  %s7 = scalar_select 0, %s6, %s4
  $region1: #{tpu_custom_call.1} parent=0
    #allocation2 [shape = 'u8[262144]{0}', space=vmem, size = 0x40000, scoped, tag = 'input window, operand 0']
    #allocation3 [shape = 's32[2]{0}', space=sflag, size = 0x8, scoped, tag = 'scoped memory for tpu_custom_call.1']
    #allocation4 [shape = 's32[2]{0}', space=sflag, size = 0x8, scoped, tag = 'scoped memory for tpu_custom_call.1']
    #allocation5 [shape = 'u8[294912]{0}', space=vmem, size = 0x48000, scoped, tag = 'input window, operand 1, single buffered']
    #allocation6 [shape = 's32[1]{0}', space=sflag, size = 0x4, scoped, tag = 'scoped memory for tpu_custom_call.1']
    #allocation7 [shape = 'u8[262144]{0}', space=vmem, size = 0x40000, scoped, tag = 'output window, operand 0']
    %8 = vsyncpa [#allocation3], 0
    %s9 = scalar_lea.sflag [#allocation3], 1
    %10 = vsyncpa %s9, 0
    %11 = vsyncpa [#allocation6], 0
    %12 = vsyncpa [#allocation4], 0
    %s13 = scalar_lea.sflag [#allocation4], 1
    %14 = vsyncpa %s13, 0
    loop: start=0, step=1, limit=4
    $region2: #{tpu_custom_call.1} parent=1 // loop_pre_header
      _
    $region3: #{tpu_custom_call.1} parent=1 // loop_header
      %s16 = sphi 0, %s20
      %p17 = scmp.ge.s32.totalorder %s16, 4
      %s26 = sphi 0, %s28
      %s29 = sphi 0, %s26
      %s30 = sphi 0, %s29
      %s46 = sphi 0, %s30
      %s50 = sphi 0, %s50
      %s52 = sphi 0, %s50
      %s53 = sphi 0, %s52
      %s67 = sphi 0, %s53
      %s71 = sphi 0, %s71
      %s73 = sphi 0, %s71
      %s74 = sphi 0, %s73
      %s88 = sphi 0, %s74
      %s94 = sphi 0, %s96
      %s97 = sphi 0, %s94
      %s98 = sphi 0, %s97
      %s114 = sphi 0, %s98
    $region4: #{tpu_custom_call.1} parent=1 // loop_header_branch
      %19 = sbr.rel (%p17) target = $region8
    $region5: #{tpu_custom_call.1} parent=1 // loop_body
      %s21 = ssub.s32 %s16, 1
      %s22 = ssub.s32 %s16, 2
      %s23 = sadd.s32 %s16, 1
      %s24 = ssub.s32 %s16, %s23
      %p25 = scmp.eq.s32.totalorder %s24, 0
      %s27 = sadd.s32 %s26, 1
      %s28 = scalar_select %p25, %s26, %s27
      %p31 = pneg %p25
      %p32 = scmp.eq.s32.totalorder %s16, 1
      %p33 = por %p31, %p32
      %p34 = scmp.ne.s32.totalorder %s26, %s29
      %p35 = scmp.eq.s32.totalorder %s16, 0
      %p36 = por %p34, %p35
      %p37 = scmp.ne.s32.totalorder %s26, %s29
      %p38 = scmp.eq.s32.totalorder %s21, 1
      %p39 = por %p37, %p38
      %p40 = scmp.ne.s32.totalorder %s29, %s30
      %p41 = scmp.eq.s32.totalorder %s21, 0
      %p42 = por %p40, %p41
      %p43 = scmp.ne.s32.totalorder %s29, %s30
      %p44 = scmp.eq.s32.totalorder %s22, 1
      %p45 = por %p43, %p44
      %p47 = scmp.ne.s32.totalorder %s30, %s46
      %p48 = scmp.eq.s32.totalorder %s22, 0
      %p49 = por %p47, %p48
      %s51 = sadd.s32 %s50, 1
      %p54 = scmp.eq.s32.totalorder %s16, 1
      %p55 = scmp.ne.s32.totalorder %s50, %s52
      %p56 = scmp.eq.s32.totalorder %s16, 0
      %p57 = por %p55, %p56
      %p58 = scmp.ne.s32.totalorder %s50, %s52
      %p59 = scmp.eq.s32.totalorder %s21, 1
      %p60 = por %p58, %p59
      %p61 = scmp.ne.s32.totalorder %s52, %s53
      %p62 = scmp.eq.s32.totalorder %s21, 0
      %p63 = por %p61, %p62
      %p64 = scmp.ne.s32.totalorder %s52, %s53
      %p65 = scmp.eq.s32.totalorder %s22, 1
      %p66 = por %p64, %p65
      %p68 = scmp.ne.s32.totalorder %s53, %s67
      %p69 = scmp.eq.s32.totalorder %s22, 0
      %p70 = por %p68, %p69
      %s72 = sadd.s32 %s71, 1
      %p75 = scmp.eq.s32.totalorder %s16, 1
      %p76 = scmp.ne.s32.totalorder %s71, %s73
      %p77 = scmp.eq.s32.totalorder %s16, 0
      %p78 = por %p76, %p77
      %p79 = scmp.ne.s32.totalorder %s71, %s73
      %p80 = scmp.eq.s32.totalorder %s21, 1
      %p81 = por %p79, %p80
      %p82 = scmp.ne.s32.totalorder %s73, %s74
      %p83 = scmp.eq.s32.totalorder %s21, 0
      %p84 = por %p82, %p83
      %p85 = scmp.ne.s32.totalorder %s73, %s74
      %p86 = scmp.eq.s32.totalorder %s22, 1
      %p87 = por %p85, %p86
      %p89 = scmp.ne.s32.totalorder %s74, %s88
      %p90 = scmp.eq.s32.totalorder %s22, 0
      %p91 = por %p89, %p90
      %s92 = ssub.s32 %s16, %s23
      %p93 = scmp.eq.s32.totalorder %s92, 0
      %s95 = sadd.s32 %s94, 1
      %s96 = scalar_select %p93, %s94, %s95
      %p99 = pneg %p93
      %p100 = scmp.eq.s32.totalorder %s16, 1
      %p101 = por %p99, %p100
      %p102 = scmp.ne.s32.totalorder %s94, %s97
      %p103 = scmp.eq.s32.totalorder %s16, 0
      %p104 = por %p102, %p103
      %p105 = scmp.ne.s32.totalorder %s94, %s97
      %p106 = scmp.eq.s32.totalorder %s21, 1
      %p107 = por %p105, %p106
      %p108 = scmp.ne.s32.totalorder %s97, %s98
      %p109 = scmp.eq.s32.totalorder %s21, 0
      %p110 = por %p108, %p109
      %p111 = scmp.ne.s32.totalorder %s97, %s98
      %p112 = scmp.eq.s32.totalorder %s22, 1
      %p113 = por %p111, %p112
      %p115 = scmp.ne.s32.totalorder %s98, %s114
      %p116 = scmp.eq.s32.totalorder %s22, 0
      %p117 = por %p115, %p116
      %p118 = scmp.le.s32.totalorder 1, %s16
      %p119 = scmp.lt.s32.totalorder %s16, 3
      %p120 = pnand %p118, %p119
      %p121 = pneg %p120
      // Predicated region
      $region9: #{tpu_custom_call.1} parent=5 // pred_check
        _
      $region10: #{tpu_custom_call.1} parent=5 // pred_check_branch
        %123 = sbr.rel (%p120) target = $region12
      $region11: #{tpu_custom_call.1} parent=5 // pred_region
        %s124 = ssub.s32 %s16, 1
        // Predicated region
        $region13: #{tpu_custom_call.1} parent=11 // pred_check
          %p125 = pneg %p63
        $region14: #{tpu_custom_call.1} parent=11 // pred_check_branch
          %127 = sbr.rel (%p125) target = $region16
        $region15: #{tpu_custom_call.1} parent=11 // pred_region
          %s129 = ssub.s32 9216, 9216
          %130 = vsyncadd [#allocation6], %s129
          %s131 = sshll.u32 [#allocation5], 4
          %s132 = int_to_ptr.vmem [resolvable:$true] %s131
          %137 = dma.hbm_to_vmem [thread:$0]  %s1, 9216, %s132, [#allocation6], 64, 64, 4
        $region16: #{tpu_custom_call.1} parent=11 // pred_fallthru
          _
        // Predicated region
        $region17: #{tpu_custom_call.1} parent=11 // pred_check
          %p138 = pneg %p84
        $region18: #{tpu_custom_call.1} parent=11 // pred_check_branch
          %140 = sbr.rel (%p138) target = $region20
        $region19: #{tpu_custom_call.1} parent=11 // pred_region
          _
        $region20: #{tpu_custom_call.1} parent=11 // pred_fallthru
          _
      $region12: #{tpu_custom_call.1} parent=5 // pred_fallthru
        _
      %p141 = scmp.lt.s32.totalorder %s16, 2
      // Predicated region
      $region21: #{tpu_custom_call.1} parent=5 // pred_check
        %p142 = pneg %p141
      $region22: #{tpu_custom_call.1} parent=5 // pred_check_branch
        %144 = sbr.rel (%p142) target = $region24
      $region23: #{tpu_custom_call.1} parent=5 // pred_region
        // Predicated region
        $region25: #{tpu_custom_call.1} parent=23 // pred_check
          %p145 = pneg %p36
        $region26: #{tpu_custom_call.1} parent=23 // pred_check_branch
          %147 = sbr.rel (%p145) target = $region28
        $region27: #{tpu_custom_call.1} parent=23 // pred_region
          %s148 = sand.u32 %s26, 1
          %s149 = scalar_lea.sflag [#allocation3], %s148
          %s150 = sand.u32 %s26, 1
          %s151 = smul.addr %s150, 256
          %s152 = scalar_lea.vmem [#allocation2], %s151
          %s154 = ssub.s32 4096, 4096
          %155 = vsyncadd %s149, %s154
          %s156 = smul.addr %s16, 32
          %s157 = smul.addr %s156, 128
          %s158 = scalar_lea.hbm %s0, %s157
          %s159 = sshll.u32 %s152, 4
          %s160 = int_to_ptr.vmem [resolvable:$true] %s159
          %165 = dma.hbm_to_vmem [thread:$0]  %s158, 4096, %s160, %s149, 128, 128, 8
        $region28: #{tpu_custom_call.1} parent=23 // pred_fallthru
          _
      $region24: #{tpu_custom_call.1} parent=5 // pred_fallthru
        _
      %p166 = scmp.le.s32.totalorder 1, %s16
      %p167 = scmp.lt.s32.totalorder %s16, 3
      %p168 = pnand %p166, %p167
      %p169 = pneg %p168
      // Predicated region
      $region29: #{tpu_custom_call.1} parent=5 // pred_check
        _
      $region30: #{tpu_custom_call.1} parent=5 // pred_check_branch
        %171 = sbr.rel (%p168) target = $region32
      $region31: #{tpu_custom_call.1} parent=5 // pred_region
        %s172 = ssub.s32 %s16, 1
        %s173 = sand.u32 %s29, 1
        %s174 = scalar_lea.sflag [#allocation3], %s173
        %s175 = sand.u32 %s29, 1
        %s176 = smul.addr %s175, 256
        %s177 = scalar_lea.vmem [#allocation2], %s176
        // Predicated region
        $region33: #{tpu_custom_call.1} parent=31 // pred_check
          %p178 = pneg %p42
        $region34: #{tpu_custom_call.1} parent=31 // pred_check_branch
          %180 = sbr.rel (%p178) target = $region36
        $region35: #{tpu_custom_call.1} parent=31 // pred_region
          %181 = dma.done %s174, 4096
        $region36: #{tpu_custom_call.1} parent=31 // pred_fallthru
          _
        // Predicated region
        $region37: #{tpu_custom_call.1} parent=31 // pred_check
          %p182 = pneg %p63
        $region38: #{tpu_custom_call.1} parent=31 // pred_check_branch
          %184 = sbr.rel (%p182) target = $region40
        $region39: #{tpu_custom_call.1} parent=31 // pred_region
          %185 = dma.done [#allocation6], 9216
        $region40: #{tpu_custom_call.1} parent=31 // pred_fallthru
          _
        %s186 = sand.u32 %s29, 1
        %s187 = scalar_lea.sflag [#allocation3], %s186
        %s188 = sand.u32 %s29, 1
        %s189 = smul.addr %s188, 256
        %s190 = scalar_lea.vmem [#allocation2], %s189
        %p191 = pneg %p42
        %p192 = pneg %p39
        %p193 = pneg %p63
        %p194 = pneg %p60
        %p195 = pneg %p84
        %p196 = pneg %p81
        %p197 = pneg %p110
        %p198 = pneg %p107
        %s199 = sand.u32 %s97, 1
        %s200 = scalar_lea.sflag [#allocation4], %s199
        %s201 = sand.u32 %s97, 1
        %s202 = smul.addr %s201, 256
        %s203 = scalar_lea.vmem [#allocation7], %s202
        %v205 = vld [vmem:[%s177] sm:$0xff]
        %v206 = vld [vmem:[%s177 + $0x8] sm:$0xff]
        %v207 = vld [vmem:[%s177 + $0x10] sm:$0xff]
        %v208 = vld [vmem:[%s177 + $0x18] sm:$0xff]
        %v209 = vld [vmem:[%s177 + $0x20] sm:$0xff]
        %v210 = vld [vmem:[%s177 + $0x28] sm:$0xff]
        %v211 = vld [vmem:[%s177 + $0x30] sm:$0xff]
        %v212 = vld [vmem:[%s177 + $0x38] sm:$0xff]
        %v213 = vld [vmem:[%s177 + $0x40] sm:$0xff]
        %v214 = vld [vmem:[%s177 + $0x48] sm:$0xff]
        %v215 = vld [vmem:[%s177 + $0x50] sm:$0xff]
        %v216 = vld [vmem:[%s177 + $0x58] sm:$0xff]
        %v217 = vld [vmem:[%s177 + $0x60] sm:$0xff]
        %v218 = vld [vmem:[%s177 + $0x68] sm:$0xff]
        %v219 = vld [vmem:[%s177 + $0x70] sm:$0xff]
        %v220 = vld [vmem:[%s177 + $0x78] sm:$0xff]
        %v221 = vld [vmem:[%s177 + $0x80] sm:$0xff]
        %v222 = vld [vmem:[%s177 + $0x88] sm:$0xff]
        %v223 = vld [vmem:[%s177 + $0x90] sm:$0xff]
        %v224 = vld [vmem:[%s177 + $0x98] sm:$0xff]
        %v225 = vld [vmem:[%s177 + $0xa0] sm:$0xff]
        %v226 = vld [vmem:[%s177 + $0xa8] sm:$0xff]
        %v227 = vld [vmem:[%s177 + $0xb0] sm:$0xff]
        %v228 = vld [vmem:[%s177 + $0xb8] sm:$0xff]
        %v229 = vld [vmem:[%s177 + $0xc0] sm:$0xff]
        %v230 = vld [vmem:[%s177 + $0xc8] sm:$0xff]
        %v231 = vld [vmem:[%s177 + $0xd0] sm:$0xff]
        %v232 = vld [vmem:[%s177 + $0xd8] sm:$0xff]
        %v233 = vld [vmem:[%s177 + $0xe0] sm:$0xff]
        %v234 = vld [vmem:[%s177 + $0xe8] sm:$0xff]
        %v235 = vld [vmem:[%s177 + $0xf0] sm:$0xff]
        %v236 = vld [vmem:[%s177 + $0xf8] sm:$0xff]
        %v253 = vrot.slane %v207, 1
        %v254 = vrot.slane %v205, 1
        %v255 = vrot.slane %v209, 1
        %v256 = vrot.slane %v211, 1
        %v257 = vrot.slane %v213, 1
        %v258 = vrot.slane %v215, 1
        %v259 = vrot.slane %v217, 1
        %v260 = vrot.slane %v219, 1
        %v261 = vrot.slane %v221, 1
        %v262 = vrot.slane %v223, 1
        %v263 = vrot.slane %v225, 1
        %v264 = vrot.slane %v227, 1
        %v265 = vrot.slane %v229, 1
        %v266 = vrot.slane %v231, 1
        %v267 = vrot.slane %v233, 1
        %v268 = vrot.slane %v235, 1
        %vm301 = vcmask 1040384
        %v302 = vrot.slane %v207, 7
        %v303 = vrot.slane %v208, 7
        %v304 = vsel %vm301, %v302, %v303
        %v305 = vrot.slane %v205, 7
        %v306 = vrot.slane %v206, 7
        %v307 = vsel %vm301, %v305, %v306
        %v308 = vrot.slane %v209, 7
        %v309 = vrot.slane %v210, 7
        %v310 = vsel %vm301, %v308, %v309
        %v311 = vrot.slane %v211, 7
        %v312 = vrot.slane %v212, 7
        %v313 = vsel %vm301, %v311, %v312
        %v314 = vrot.slane %v213, 7
        %v315 = vrot.slane %v214, 7
        %v316 = vsel %vm301, %v314, %v315
        %v317 = vrot.slane %v215, 7
        %v318 = vrot.slane %v216, 7
        %v319 = vsel %vm301, %v317, %v318
        %v320 = vrot.slane %v217, 7
        %v321 = vrot.slane %v218, 7
        %v322 = vsel %vm301, %v320, %v321
        %v323 = vrot.slane %v219, 7
        %v324 = vrot.slane %v220, 7
        %v325 = vsel %vm301, %v323, %v324
        %v326 = vrot.slane %v221, 7
        %v327 = vrot.slane %v222, 7
        %v328 = vsel %vm301, %v326, %v327
        %v329 = vrot.slane %v223, 7
        %v330 = vrot.slane %v224, 7
        %v331 = vsel %vm301, %v329, %v330
        %v332 = vrot.slane %v225, 7
        %v333 = vrot.slane %v226, 7
        %v334 = vsel %vm301, %v332, %v333
        %v335 = vrot.slane %v227, 7
        %v336 = vrot.slane %v228, 7
        %v337 = vsel %vm301, %v335, %v336
        %v338 = vrot.slane %v229, 7
        %v339 = vrot.slane %v230, 7
        %v340 = vsel %vm301, %v338, %v339
        %v341 = vrot.slane %v231, 7
        %v342 = vrot.slane %v232, 7
        %v343 = vsel %vm301, %v341, %v342
        %v344 = vrot.slane %v233, 7
        %v345 = vrot.slane %v234, 7
        %v346 = vsel %vm301, %v344, %v345
        %v347 = vrot.slane %v235, 7
        %v348 = vrot.slane %v236, 7
        %v349 = vsel %vm301, %v347, %v348
        %v398 = vrot.slane %v208, 5
        %v399 = vrot.slane %v206, 5
        %v400 = vrot.slane %v210, 5
        %v401 = vrot.slane %v212, 5
        %v402 = vrot.slane %v214, 5
        %v403 = vrot.slane %v216, 5
        %v404 = vrot.slane %v218, 5
        %v405 = vrot.slane %v220, 5
        %v406 = vrot.slane %v222, 5
        %v407 = vrot.slane %v224, 5
        %v408 = vrot.slane %v226, 5
        %v409 = vrot.slane %v228, 5
        %v410 = vrot.slane %v230, 5
        %v411 = vrot.slane %v232, 5
        %v412 = vrot.slane %v234, 5
        %v413 = vrot.slane %v236, 5
        %v430 = vsel %vm301, %v253, %v302
        %v431 = vsel %vm301, %v254, %v305
        %v432 = vsel %vm301, %v255, %v308
        %v433 = vsel %vm301, %v256, %v311
        %v434 = vsel %vm301, %v257, %v314
        %v435 = vsel %vm301, %v258, %v317
        %v436 = vsel %vm301, %v259, %v320
        %v437 = vsel %vm301, %v260, %v323
        %v438 = vsel %vm301, %v261, %v326
        %v439 = vsel %vm301, %v262, %v329
        %v440 = vsel %vm301, %v263, %v332
        %v441 = vsel %vm301, %v264, %v335
        %v442 = vsel %vm301, %v265, %v338
        %v443 = vsel %vm301, %v266, %v341
        %v444 = vsel %vm301, %v267, %v344
        %v445 = vsel %vm301, %v268, %v347
        %v446 = vsel %vm301, %v303, %v398
        %v447 = vsel %vm301, %v306, %v399
        %v448 = vsel %vm301, %v309, %v400
        %v449 = vsel %vm301, %v312, %v401
        %v450 = vsel %vm301, %v315, %v402
        %v451 = vsel %vm301, %v318, %v403
        %v452 = vsel %vm301, %v321, %v404
        %v453 = vsel %vm301, %v324, %v405
        %v454 = vsel %vm301, %v327, %v406
        %v455 = vsel %vm301, %v330, %v407
        %v456 = vsel %vm301, %v333, %v408
        %v457 = vsel %vm301, %v336, %v409
        %v458 = vsel %vm301, %v339, %v410
        %v459 = vsel %vm301, %v342, %v411
        %v460 = vsel %vm301, %v345, %v412
        %v461 = vsel %vm301, %v348, %v413
        %vm492 = vcmask 1046528
        %v493 = vrot.slane %v430, 1
        %v494 = vrot.slane %v304, 1
        %v495 = vsel %vm492, %v493, %v494
        %v496 = vrot.slane %v446, 1
        %v497 = vsel %vm492, %v494, %v496
        %v498 = vrot.slane %v431, 1
        %v499 = vrot.slane %v307, 1
        %v500 = vsel %vm492, %v498, %v499
        %v501 = vrot.slane %v447, 1
        %v502 = vsel %vm492, %v499, %v501
        %v503 = vrot.slane %v432, 1
        %v504 = vrot.slane %v310, 1
        %v505 = vsel %vm492, %v503, %v504
        %v506 = vrot.slane %v448, 1
        %v507 = vsel %vm492, %v504, %v506
        %v508 = vrot.slane %v433, 1
        %v509 = vrot.slane %v313, 1
        %v510 = vsel %vm492, %v508, %v509
        %v511 = vrot.slane %v449, 1
        %v512 = vsel %vm492, %v509, %v511
        %v513 = vrot.slane %v434, 1
        %v514 = vrot.slane %v316, 1
        %v515 = vsel %vm492, %v513, %v514
        %v516 = vrot.slane %v450, 1
        %v517 = vsel %vm492, %v514, %v516
        %v518 = vrot.slane %v435, 1
        %v519 = vrot.slane %v319, 1
        %v520 = vsel %vm492, %v518, %v519
        %v521 = vrot.slane %v451, 1
        %v522 = vsel %vm492, %v519, %v521
        %v523 = vrot.slane %v436, 1
        %v524 = vrot.slane %v322, 1
        %v525 = vsel %vm492, %v523, %v524
        %v526 = vrot.slane %v452, 1
        %v527 = vsel %vm492, %v524, %v526
        %v528 = vrot.slane %v437, 1
        %v529 = vrot.slane %v325, 1
        %v530 = vsel %vm492, %v528, %v529
        %v531 = vrot.slane %v453, 1
        %v532 = vsel %vm492, %v529, %v531
        %v533 = vrot.slane %v438, 1
        %v534 = vrot.slane %v328, 1
        %v535 = vsel %vm492, %v533, %v534
        %v536 = vrot.slane %v454, 1
        %v537 = vsel %vm492, %v534, %v536
        %v538 = vrot.slane %v439, 1
        %v539 = vrot.slane %v331, 1
        %v540 = vsel %vm492, %v538, %v539
        %v541 = vrot.slane %v455, 1
        %v542 = vsel %vm492, %v539, %v541
        %v543 = vrot.slane %v440, 1
        %v544 = vrot.slane %v334, 1
        %v545 = vsel %vm492, %v543, %v544
        %v546 = vrot.slane %v456, 1
        %v547 = vsel %vm492, %v544, %v546
        %v548 = vrot.slane %v441, 1
        %v549 = vrot.slane %v337, 1
        %v550 = vsel %vm492, %v548, %v549
        %v551 = vrot.slane %v457, 1
        %v552 = vsel %vm492, %v549, %v551
        %v553 = vrot.slane %v442, 1
        %v554 = vrot.slane %v340, 1
        %v555 = vsel %vm492, %v553, %v554
        %v556 = vrot.slane %v458, 1
        %v557 = vsel %vm492, %v554, %v556
        %v558 = vrot.slane %v443, 1
        %v559 = vrot.slane %v343, 1
        %v560 = vsel %vm492, %v558, %v559
        %v561 = vrot.slane %v459, 1
        %v562 = vsel %vm492, %v559, %v561
        %v563 = vrot.slane %v444, 1
        %v564 = vrot.slane %v346, 1
        %v565 = vsel %vm492, %v563, %v564
        %v566 = vrot.slane %v460, 1
        %v567 = vsel %vm492, %v564, %v566
        %vm598 = vcmask 1045504
        %v599 = vrot.slane %v430, 2
        %v600 = vrot.slane %v304, 2
        %v601 = vsel %vm598, %v599, %v600
        %v602 = vrot.slane %v446, 2
        %v603 = vsel %vm598, %v600, %v602
        %v604 = vrot.slane %v431, 2
        %v605 = vrot.slane %v307, 2
        %v606 = vsel %vm598, %v604, %v605
        %v607 = vrot.slane %v447, 2
        %v608 = vsel %vm598, %v605, %v607
        %v609 = vrot.slane %v432, 2
        %v610 = vrot.slane %v310, 2
        %v611 = vsel %vm598, %v609, %v610
        %v612 = vrot.slane %v448, 2
        %v613 = vsel %vm598, %v610, %v612
        %v614 = vrot.slane %v433, 2
        %v615 = vrot.slane %v313, 2
        %v616 = vsel %vm598, %v614, %v615
        %v617 = vrot.slane %v449, 2
        %v618 = vsel %vm598, %v615, %v617
        %v619 = vrot.slane %v434, 2
        %v620 = vrot.slane %v316, 2
        %v621 = vsel %vm598, %v619, %v620
        %v622 = vrot.slane %v450, 2
        %v623 = vsel %vm598, %v620, %v622
        %v624 = vrot.slane %v435, 2
        %v625 = vrot.slane %v319, 2
        %v626 = vsel %vm598, %v624, %v625
        %v627 = vrot.slane %v451, 2
        %v628 = vsel %vm598, %v625, %v627
        %v629 = vrot.slane %v436, 2
        %v630 = vrot.slane %v322, 2
        %v631 = vsel %vm598, %v629, %v630
        %v632 = vrot.slane %v452, 2
        %v633 = vsel %vm598, %v630, %v632
        %v634 = vrot.slane %v437, 2
        %v635 = vrot.slane %v325, 2
        %v636 = vsel %vm598, %v634, %v635
        %v637 = vrot.slane %v453, 2
        %v638 = vsel %vm598, %v635, %v637
        %v639 = vrot.slane %v438, 2
        %v640 = vrot.slane %v328, 2
        %v641 = vsel %vm598, %v639, %v640
        %v642 = vrot.slane %v454, 2
        %v643 = vsel %vm598, %v640, %v642
        %v644 = vrot.slane %v439, 2
        %v645 = vrot.slane %v331, 2
        %v646 = vsel %vm598, %v644, %v645
        %v647 = vrot.slane %v455, 2
        %v648 = vsel %vm598, %v645, %v647
        %v649 = vrot.slane %v440, 2
        %v650 = vrot.slane %v334, 2
        %v651 = vsel %vm598, %v649, %v650
        %v652 = vrot.slane %v456, 2
        %v653 = vsel %vm598, %v650, %v652
        %v654 = vrot.slane %v441, 2
        %v655 = vrot.slane %v337, 2
        %v656 = vsel %vm598, %v654, %v655
        %v657 = vrot.slane %v457, 2
        %v658 = vsel %vm598, %v655, %v657
        %v659 = vrot.slane %v442, 2
        %v660 = vrot.slane %v340, 2
        %v661 = vsel %vm598, %v659, %v660
        %v662 = vrot.slane %v458, 2
        %v663 = vsel %vm598, %v660, %v662
        %v664 = vrot.slane %v443, 2
        %v665 = vrot.slane %v343, 2
        %v666 = vsel %vm598, %v664, %v665
        %v667 = vrot.slane %v459, 2
        %v668 = vsel %vm598, %v665, %v667
        %v669 = vrot.slane %v444, 2
        %v670 = vrot.slane %v346, 2
        %v671 = vsel %vm598, %v669, %v670
        %v672 = vrot.slane %v460, 2
        %v673 = vsel %vm598, %v670, %v672
        %v706 = vrot.slane %v445, 1
        %v707 = vrot.slane %v349, 1
        %v708 = vsel %vm492, %v706, %v707
        %v709 = vrot.slane %v461, 1
        %v710 = vsel %vm492, %v707, %v709
        %v713 = vrot.slane %v445, 2
        %v714 = vrot.slane %v349, 2
        %v715 = vsel %vm598, %v713, %v714
        %v716 = vrot.slane %v461, 2
        %v717 = vsel %vm598, %v714, %v716
        %v720 = vpack.c.bf16 %v304, %v430
        %v721 = vpack.c.bf16 %v497, %v495
        %v722 = vpack.c.bf16 %v603, %v601
        %v723 = vpack.c.bf16 %v307, %v431
        %v724 = vpack.c.bf16 %v502, %v500
        %v725 = vpack.c.bf16 %v608, %v606
        %v726 = vpack.c.bf16 %v310, %v432
        %v727 = vpack.c.bf16 %v507, %v505
        %v728 = vpack.c.bf16 %v613, %v611
        %v729 = vpack.c.bf16 %v313, %v433
        %v730 = vpack.c.bf16 %v512, %v510
        %v731 = vpack.c.bf16 %v618, %v616
        %v732 = vpack.c.bf16 %v316, %v434
        %v733 = vpack.c.bf16 %v517, %v515
        %v734 = vpack.c.bf16 %v623, %v621
        %v735 = vpack.c.bf16 %v319, %v435
        %v736 = vpack.c.bf16 %v522, %v520
        %v737 = vpack.c.bf16 %v628, %v626
        %v738 = vpack.c.bf16 %v322, %v436
        %v739 = vpack.c.bf16 %v527, %v525
        %v740 = vpack.c.bf16 %v633, %v631
        %v741 = vpack.c.bf16 %v325, %v437
        %v742 = vpack.c.bf16 %v532, %v530
        %v743 = vpack.c.bf16 %v638, %v636
        %v744 = vpack.c.bf16 %v328, %v438
        %v745 = vpack.c.bf16 %v537, %v535
        %v746 = vpack.c.bf16 %v643, %v641
        %v747 = vpack.c.bf16 %v331, %v439
        %v748 = vpack.c.bf16 %v542, %v540
        %v749 = vpack.c.bf16 %v648, %v646
        %v750 = vpack.c.bf16 %v334, %v440
        %v751 = vpack.c.bf16 %v547, %v545
        %v752 = vpack.c.bf16 %v653, %v651
        %v753 = vpack.c.bf16 %v337, %v441
        %v754 = vpack.c.bf16 %v552, %v550
        %v755 = vpack.c.bf16 %v658, %v656
        %v756 = vpack.c.bf16 %v340, %v442
        %v757 = vpack.c.bf16 %v557, %v555
        %v758 = vpack.c.bf16 %v663, %v661
        %v759 = vpack.c.bf16 %v343, %v443
        %v760 = vpack.c.bf16 %v562, %v560
        %v761 = vpack.c.bf16 %v668, %v666
        %v762 = vpack.c.bf16 %v346, %v444
        %v763 = vpack.c.bf16 %v567, %v565
        %v764 = vpack.c.bf16 %v673, %v671
        %v765 = vpack.c.bf16 %v349, %v445
        %v766 = vpack.c.bf16 %v710, %v708
        %v767 = vpack.c.bf16 %v717, %v715
        %v768 = vld [vmem:[#allocation5] sm:$0xf]
        %v769 = vld [vmem:[#allocation5 + $0x4] sm:$0xf]
        %v770 = vld [vmem:[#allocation5 + $0x8] sm:$0xf]
        %v771 = vld [vmem:[#allocation5 + $0xc] sm:$0xf]
        %v772 = vld [vmem:[#allocation5 + $0x10] sm:$0xf]
        %v773 = vld [vmem:[#allocation5 + $0x14] sm:$0xf]
        %v774 = vld [vmem:[#allocation5 + $0x18] sm:$0xf]
        %v775 = vld [vmem:[#allocation5 + $0x1c] sm:$0xf]
        %v776 = vld [vmem:[#allocation5 + $0x20] sm:$0xf]
        %v777 = vld [vmem:[#allocation5 + $0x24] sm:$0xf]
        %v778 = vld [vmem:[#allocation5 + $0x28] sm:$0xf]
        %v779 = vld [vmem:[#allocation5 + $0x2c] sm:$0xf]
        %v780 = vld [vmem:[#allocation5 + $0x30] sm:$0xf]
        %v781 = vld [vmem:[#allocation5 + $0x34] sm:$0xf]
        %v782 = vld [vmem:[#allocation5 + $0x38] sm:$0xf]
        %v783 = vld [vmem:[#allocation5 + $0x3c] sm:$0xf]
        %v784 = vld [vmem:[#allocation5 + $0x40] sm:$0xf]
        %v785 = vld [vmem:[#allocation5 + $0x44] sm:$0xf]
        %v786 = vld [vmem:[#allocation5 + $0x48] sm:$0xf]
        %v787 = vld [vmem:[#allocation5 + $0x4c] sm:$0xf]
        %v788 = vld [vmem:[#allocation5 + $0x50] sm:$0xf]
        %v789 = vld [vmem:[#allocation5 + $0x54] sm:$0xf]
        %v790 = vld [vmem:[#allocation5 + $0x58] sm:$0xf]
        %v791 = vld [vmem:[#allocation5 + $0x5c] sm:$0xf]
        %v792 = vld [vmem:[#allocation5 + $0x60] sm:$0xf]
        %v793 = vld [vmem:[#allocation5 + $0x64] sm:$0xf]
        %v794 = vld [vmem:[#allocation5 + $0x68] sm:$0xf]
        %v795 = vld [vmem:[#allocation5 + $0x6c] sm:$0xf]
        %v796 = vld [vmem:[#allocation5 + $0x70] sm:$0xf]
        %v797 = vld [vmem:[#allocation5 + $0x74] sm:$0xf]
        %v798 = vld [vmem:[#allocation5 + $0x78] sm:$0xf]
        %v799 = vld [vmem:[#allocation5 + $0x7c] sm:$0xf]
        %v800 = vld [vmem:[#allocation5 + $0x80] sm:$0xf]
        %v801 = vld [vmem:[#allocation5 + $0x84] sm:$0xf]
        %v802 = vld [vmem:[#allocation5 + $0x88] sm:$0xf]
        %v803 = vld [vmem:[#allocation5 + $0x8c] sm:$0xf]
        %v804 = vld [vmem:[#allocation5 + $0x90] sm:$0xf]
        %v805 = vld [vmem:[#allocation5 + $0x94] sm:$0xf]
        %v806 = vld [vmem:[#allocation5 + $0x98] sm:$0xf]
        %v807 = vld [vmem:[#allocation5 + $0x9c] sm:$0xf]
        %v808 = vld [vmem:[#allocation5 + $0xa0] sm:$0xf]
        %v809 = vld [vmem:[#allocation5 + $0xa4] sm:$0xf]
        %v810 = vld [vmem:[#allocation5 + $0xa8] sm:$0xf]
        %v811 = vld [vmem:[#allocation5 + $0xac] sm:$0xf]
        %v812 = vld [vmem:[#allocation5 + $0xb0] sm:$0xf]
        %v813 = vld [vmem:[#allocation5 + $0xb4] sm:$0xf]
        %v814 = vld [vmem:[#allocation5 + $0xb8] sm:$0xf]
        %v815 = vld [vmem:[#allocation5 + $0xbc] sm:$0xf]
        %v816 = vld [vmem:[#allocation5 + $0xc0] sm:$0xf]
        %v817 = vld [vmem:[#allocation5 + $0xc4] sm:$0xf]
        %v818 = vld [vmem:[#allocation5 + $0xc8] sm:$0xf]
        %v819 = vld [vmem:[#allocation5 + $0xcc] sm:$0xf]
        %v820 = vld [vmem:[#allocation5 + $0xd0] sm:$0xf]
        %v821 = vld [vmem:[#allocation5 + $0xd4] sm:$0xf]
        %v822 = vld [vmem:[#allocation5 + $0xd8] sm:$0xf]
        %v823 = vld [vmem:[#allocation5 + $0xdc] sm:$0xf]
        %v824 = vld [vmem:[#allocation5 + $0xe0] sm:$0xf]
        %v825 = vld [vmem:[#allocation5 + $0xe4] sm:$0xf]
        %v826 = vld [vmem:[#allocation5 + $0xe8] sm:$0xf]
        %v827 = vld [vmem:[#allocation5 + $0xec] sm:$0xf]
        %v828 = vld [vmem:[#allocation5 + $0xf0] sm:$0xf]
        %v829 = vld [vmem:[#allocation5 + $0xf4] sm:$0xf]
        %v830 = vld [vmem:[#allocation5 + $0xf8] sm:$0xf]
        %v831 = vld [vmem:[#allocation5 + $0xfc] sm:$0xf]
        %v832 = vld [vmem:[#allocation5 + $0x100] sm:$0xf]
        %v833 = vld [vmem:[#allocation5 + $0x104] sm:$0xf]
        %v834 = vld [vmem:[#allocation5 + $0x108] sm:$0xf]
        %v835 = vld [vmem:[#allocation5 + $0x10c] sm:$0xf]
        %v836 = vld [vmem:[#allocation5 + $0x110] sm:$0xf]
        %v837 = vld [vmem:[#allocation5 + $0x114] sm:$0xf]
        %v838 = vld [vmem:[#allocation5 + $0x118] sm:$0xf]
        %v839 = vld [vmem:[#allocation5 + $0x11c] sm:$0xf]
        %v840 = vld [vmem:[#allocation5 + $0x120] sm:$0xf]
        %v841 = vld [vmem:[#allocation5 + $0x124] sm:$0xf]
        %v842 = vld [vmem:[#allocation5 + $0x128] sm:$0xf]
        %v843 = vld [vmem:[#allocation5 + $0x12c] sm:$0xf]
        %v844 = vld [vmem:[#allocation5 + $0x130] sm:$0xf]
        %v845 = vld [vmem:[#allocation5 + $0x134] sm:$0xf]
        %v846 = vld [vmem:[#allocation5 + $0x138] sm:$0xf]
        %v847 = vld [vmem:[#allocation5 + $0x13c] sm:$0xf]
        %v848 = vld [vmem:[#allocation5 + $0x140] sm:$0xf]
        %v849 = vld [vmem:[#allocation5 + $0x144] sm:$0xf]
        %v850 = vld [vmem:[#allocation5 + $0x148] sm:$0xf]
        %v851 = vld [vmem:[#allocation5 + $0x14c] sm:$0xf]
        %v852 = vld [vmem:[#allocation5 + $0x150] sm:$0xf]
        %v853 = vld [vmem:[#allocation5 + $0x154] sm:$0xf]
        %v854 = vld [vmem:[#allocation5 + $0x158] sm:$0xf]
        %v855 = vld [vmem:[#allocation5 + $0x15c] sm:$0xf]
        %v856 = vld [vmem:[#allocation5 + $0x160] sm:$0xf]
        %v857 = vld [vmem:[#allocation5 + $0x164] sm:$0xf]
        %v858 = vld [vmem:[#allocation5 + $0x168] sm:$0xf]
        %v859 = vld [vmem:[#allocation5 + $0x16c] sm:$0xf]
        %v860 = vld [vmem:[#allocation5 + $0x170] sm:$0xf]
        %v861 = vld [vmem:[#allocation5 + $0x174] sm:$0xf]
        %v862 = vld [vmem:[#allocation5 + $0x178] sm:$0xf]
        %v863 = vld [vmem:[#allocation5 + $0x17c] sm:$0xf]
        %v864 = vld [vmem:[#allocation5 + $0x180] sm:$0xf]
        %v865 = vld [vmem:[#allocation5 + $0x184] sm:$0xf]
        %v866 = vld [vmem:[#allocation5 + $0x188] sm:$0xf]
        %v867 = vld [vmem:[#allocation5 + $0x18c] sm:$0xf]
        %v868 = vld [vmem:[#allocation5 + $0x190] sm:$0xf]
        %v869 = vld [vmem:[#allocation5 + $0x194] sm:$0xf]
        %v870 = vld [vmem:[#allocation5 + $0x198] sm:$0xf]
        %v871 = vld [vmem:[#allocation5 + $0x19c] sm:$0xf]
        %v872 = vld [vmem:[#allocation5 + $0x1a0] sm:$0xf]
        %v873 = vld [vmem:[#allocation5 + $0x1a4] sm:$0xf]
        %v874 = vld [vmem:[#allocation5 + $0x1a8] sm:$0xf]
        %v875 = vld [vmem:[#allocation5 + $0x1ac] sm:$0xf]
        %v876 = vld [vmem:[#allocation5 + $0x1b0] sm:$0xf]
        %v877 = vld [vmem:[#allocation5 + $0x1b4] sm:$0xf]
        %v878 = vld [vmem:[#allocation5 + $0x1b8] sm:$0xf]
        %v879 = vld [vmem:[#allocation5 + $0x1bc] sm:$0xf]
        %v880 = vld [vmem:[#allocation5 + $0x1c0] sm:$0xf]
        %v881 = vld [vmem:[#allocation5 + $0x1c4] sm:$0xf]
        %v882 = vld [vmem:[#allocation5 + $0x1c8] sm:$0xf]
        %v883 = vld [vmem:[#allocation5 + $0x1cc] sm:$0xf]
        %v884 = vld [vmem:[#allocation5 + $0x1d0] sm:$0xf]
        %v885 = vld [vmem:[#allocation5 + $0x1d4] sm:$0xf]
        %v886 = vld [vmem:[#allocation5 + $0x1d8] sm:$0xf]
        %v887 = vld [vmem:[#allocation5 + $0x1dc] sm:$0xf]
        %v888 = vld [vmem:[#allocation5 + $0x1e0] sm:$0xf]
        %v889 = vld [vmem:[#allocation5 + $0x1e4] sm:$0xf]
        %v890 = vld [vmem:[#allocation5 + $0x1e8] sm:$0xf]
        %v891 = vld [vmem:[#allocation5 + $0x1ec] sm:$0xf]
        %v892 = vld [vmem:[#allocation5 + $0x1f0] sm:$0xf]
        %v893 = vld [vmem:[#allocation5 + $0x1f4] sm:$0xf]
        %v894 = vld [vmem:[#allocation5 + $0x1f8] sm:$0xf]
        %v895 = vld [vmem:[#allocation5 + $0x1fc] sm:$0xf]
        %v896 = vld [vmem:[#allocation5 + $0x200] sm:$0xf]
        %v897 = vld [vmem:[#allocation5 + $0x204] sm:$0xf]
        %v898 = vld [vmem:[#allocation5 + $0x208] sm:$0xf]
        %v899 = vld [vmem:[#allocation5 + $0x20c] sm:$0xf]
        %v900 = vld [vmem:[#allocation5 + $0x210] sm:$0xf]
        %v901 = vld [vmem:[#allocation5 + $0x214] sm:$0xf]
        %v902 = vld [vmem:[#allocation5 + $0x218] sm:$0xf]
        %v903 = vld [vmem:[#allocation5 + $0x21c] sm:$0xf]
        %v904 = vld [vmem:[#allocation5 + $0x220] sm:$0xf]
        %v905 = vld [vmem:[#allocation5 + $0x224] sm:$0xf]
        %v906 = vld [vmem:[#allocation5 + $0x228] sm:$0xf]
        %v907 = vld [vmem:[#allocation5 + $0x22c] sm:$0xf]
        %v908 = vld [vmem:[#allocation5 + $0x230] sm:$0xf]
        %v909 = vld [vmem:[#allocation5 + $0x234] sm:$0xf]
        %v910 = vld [vmem:[#allocation5 + $0x238] sm:$0xf]
        %v911 = vld [vmem:[#allocation5 + $0x23c] sm:$0xf]
        %v912 = vld [vmem:[%s2] sm:$0x1]
        %v914 = vlaneseq
        %v915 = vshrl.u32 %v914, 7
        %v916 = vsub.s32 0, %v915
        %v917 = vrot.slane %v912, %v916
        %v1063 = vunpack.c.l.b16 %v768
        %v1064 = vunpack.c.l.b16 %v769
        %v1065 = vunpack.c.l.b16 %v770
        %v1066 = vunpack.c.l.b16 %v771
        %v1067 = vunpack.c.l.b16 %v772
        %v1068 = vunpack.c.l.b16 %v773
        %v1069 = vunpack.c.l.b16 %v774
        %v1070 = vunpack.c.l.b16 %v775
        %v1071 = vunpack.c.l.b16 %v776
        %v1072 = vunpack.c.l.b16 %v777
        %v1073 = vunpack.c.l.b16 %v778
        %v1074 = vunpack.c.l.b16 %v779
        %v1075 = vunpack.c.l.b16 %v780
        %v1076 = vunpack.c.l.b16 %v781
        %v1077 = vunpack.c.l.b16 %v782
        %v1078 = vunpack.c.l.b16 %v783
        %v1079 = vunpack.c.l.b16 %v784
        %v1080 = vunpack.c.l.b16 %v785
        %v1081 = vunpack.c.l.b16 %v786
        %v1082 = vunpack.c.l.b16 %v787
        %v1083 = vunpack.c.l.b16 %v788
        %v1084 = vunpack.c.l.b16 %v789
        %v1085 = vunpack.c.l.b16 %v790
        %v1086 = vunpack.c.l.b16 %v791
        %v1087 = vunpack.c.l.b16 %v792
        %v1088 = vunpack.c.l.b16 %v793
        %v1089 = vunpack.c.l.b16 %v794
        %v1090 = vunpack.c.l.b16 %v795
        %v1091 = vunpack.c.l.b16 %v796
        %v1092 = vunpack.c.l.b16 %v797
        %v1093 = vunpack.c.l.b16 %v798
        %v1094 = vunpack.c.l.b16 %v799
        %v1095 = vunpack.c.l.b16 %v800
        %v1096 = vunpack.c.l.b16 %v801
        %v1097 = vunpack.c.l.b16 %v802
        %v1098 = vunpack.c.l.b16 %v803
        %v1099 = vunpack.c.l.b16 %v804
        %v1100 = vunpack.c.l.b16 %v805
        %v1101 = vunpack.c.l.b16 %v806
        %v1102 = vunpack.c.l.b16 %v807
        %v1103 = vunpack.c.l.b16 %v808
        %v1104 = vunpack.c.l.b16 %v809
        %v1105 = vunpack.c.l.b16 %v810
        %v1106 = vunpack.c.l.b16 %v811
        %v1107 = vunpack.c.l.b16 %v812
        %v1108 = vunpack.c.l.b16 %v813
        %v1109 = vunpack.c.l.b16 %v814
        %v1110 = vunpack.c.l.b16 %v815
        %v1111 = vunpack.c.l.b16 %v816
        %v1112 = vunpack.c.l.b16 %v817
        %v1113 = vunpack.c.l.b16 %v818
        %v1114 = vunpack.c.l.b16 %v819
        %v1115 = vunpack.c.l.b16 %v820
        %v1116 = vunpack.c.l.b16 %v821
        %v1117 = vunpack.c.l.b16 %v822
        %v1118 = vunpack.c.l.b16 %v823
        %v1119 = vunpack.c.l.b16 %v824
        %v1120 = vunpack.c.l.b16 %v825
        %v1121 = vunpack.c.l.b16 %v826
        %v1122 = vunpack.c.l.b16 %v827
        %v1123 = vunpack.c.l.b16 %v828
        %v1124 = vunpack.c.l.b16 %v829
        %v1125 = vunpack.c.l.b16 %v830
        %v1126 = vunpack.c.l.b16 %v831
        %v1127 = vunpack.c.l.b16 %v832
        %v1128 = vunpack.c.l.b16 %v833
        %v1129 = vunpack.c.l.b16 %v834
        %v1130 = vunpack.c.l.b16 %v835
        %v1131 = vunpack.c.l.b16 %v836
        %v1132 = vunpack.c.l.b16 %v837
        %v1133 = vunpack.c.l.b16 %v838
        %v1134 = vunpack.c.l.b16 %v839
        %v1135 = vunpack.c.l.b16 %v840
        %v1136 = vunpack.c.l.b16 %v841
        %v1137 = vunpack.c.l.b16 %v842
        %v1138 = vunpack.c.l.b16 %v843
        %v1139 = vunpack.c.l.b16 %v844
        %v1140 = vunpack.c.l.b16 %v845
        %v1141 = vunpack.c.l.b16 %v846
        %v1142 = vunpack.c.l.b16 %v847
        %v1143 = vunpack.c.l.b16 %v848
        %v1144 = vunpack.c.l.b16 %v849
        %v1145 = vunpack.c.l.b16 %v850
        %v1146 = vunpack.c.l.b16 %v851
        %v1147 = vunpack.c.l.b16 %v852
        %v1148 = vunpack.c.l.b16 %v853
        %v1149 = vunpack.c.l.b16 %v854
        %v1150 = vunpack.c.l.b16 %v855
        %v1151 = vunpack.c.l.b16 %v856
        %v1152 = vunpack.c.l.b16 %v857
        %v1153 = vunpack.c.l.b16 %v858
        %v1154 = vunpack.c.l.b16 %v859
        %v1155 = vunpack.c.l.b16 %v860
        %v1156 = vunpack.c.l.b16 %v861
        %v1157 = vunpack.c.l.b16 %v862
        %v1158 = vunpack.c.l.b16 %v863
        %v1159 = vunpack.c.l.b16 %v864
        %v1160 = vunpack.c.l.b16 %v865
        %v1161 = vunpack.c.l.b16 %v866
        %v1162 = vunpack.c.l.b16 %v867
        %v1163 = vunpack.c.l.b16 %v868
        %v1164 = vunpack.c.l.b16 %v869
        %v1165 = vunpack.c.l.b16 %v870
        %v1166 = vunpack.c.l.b16 %v871
        %v1167 = vunpack.c.l.b16 %v872
        %v1168 = vunpack.c.l.b16 %v873
        %v1169 = vunpack.c.l.b16 %v874
        %v1170 = vunpack.c.l.b16 %v875
        %v1171 = vunpack.c.l.b16 %v876
        %v1172 = vunpack.c.l.b16 %v877
        %v1173 = vunpack.c.l.b16 %v878
        %v1174 = vunpack.c.l.b16 %v879
        %v1175 = vunpack.c.l.b16 %v880
        %v1176 = vunpack.c.l.b16 %v881
        %v1177 = vunpack.c.l.b16 %v882
        %v1178 = vunpack.c.l.b16 %v883
        %v1179 = vunpack.c.l.b16 %v884
        %v1180 = vunpack.c.l.b16 %v885
        %v1181 = vunpack.c.l.b16 %v886
        %v1182 = vunpack.c.l.b16 %v887
        %v1183 = vunpack.c.l.b16 %v888
        %v1184 = vunpack.c.l.b16 %v889
        %v1185 = vunpack.c.l.b16 %v890
        %v1186 = vunpack.c.l.b16 %v891
        %v1187 = vunpack.c.l.b16 %v892
        %v1188 = vunpack.c.l.b16 %v893
        %v1189 = vunpack.c.l.b16 %v894
        %v1190 = vunpack.c.l.b16 %v895
        %v1191 = vunpack.c.l.b16 %v896
        %v1192 = vunpack.c.l.b16 %v897
        %v1193 = vunpack.c.l.b16 %v898
        %v1194 = vunpack.c.l.b16 %v899
        %v1195 = vunpack.c.l.b16 %v900
        %v1196 = vunpack.c.l.b16 %v901
        %v1197 = vunpack.c.l.b16 %v902
        %v1198 = vunpack.c.l.b16 %v903
        %v1199 = vunpack.c.l.b16 %v904
        %v1200 = vunpack.c.l.b16 %v905
        %v1201 = vunpack.c.l.b16 %v906
        %v1202 = vunpack.c.l.b16 %v907
        %v1203 = vunpack.c.l.b16 %v908
        %v1204 = vunpack.c.l.b16 %v909
        %v1205 = vunpack.c.l.b16 %v910
        %v1206 = vunpack.c.l.b16 %v911
        %v1207 = vpack.c.b16 %v1064, %v1063
        %v1208 = vpack.c.b16 %v1066, %v1065
        %v1209 = vpack.c.b16 %v1068, %v1067
        %v1210 = vpack.c.b16 %v1070, %v1069
        %v1211 = vpack.c.b16 %v1072, %v1071
        %v1212 = vpack.c.b16 %v1074, %v1073
        %v1213 = vpack.c.b16 %v1076, %v1075
        %v1214 = vpack.c.b16 %v1078, %v1077
        %v1215 = vpack.c.b16 %v1080, %v1079
        %v1216 = vpack.c.b16 %v1082, %v1081
        %v1217 = vpack.c.b16 %v1084, %v1083
        %v1218 = vpack.c.b16 %v1086, %v1085
        %v1219 = vpack.c.b16 %v1088, %v1087
        %v1220 = vpack.c.b16 %v1090, %v1089
        %v1221 = vpack.c.b16 %v1092, %v1091
        %v1222 = vpack.c.b16 %v1094, %v1093
        %v1223 = vpack.c.b16 %v1096, %v1095
        %v1224 = vpack.c.b16 %v1098, %v1097
        %v1225 = vpack.c.b16 %v1100, %v1099
        %v1226 = vpack.c.b16 %v1102, %v1101
        %v1227 = vpack.c.b16 %v1104, %v1103
        %v1228 = vpack.c.b16 %v1106, %v1105
        %v1229 = vpack.c.b16 %v1108, %v1107
        %v1230 = vpack.c.b16 %v1110, %v1109
        %v1231 = vpack.c.b16 %v1112, %v1111
        %v1232 = vpack.c.b16 %v1114, %v1113
        %v1233 = vpack.c.b16 %v1116, %v1115
        %v1234 = vpack.c.b16 %v1118, %v1117
        %v1235 = vpack.c.b16 %v1120, %v1119
        %v1236 = vpack.c.b16 %v1122, %v1121
        %v1237 = vpack.c.b16 %v1124, %v1123
        %v1238 = vpack.c.b16 %v1126, %v1125
        %v1239 = vpack.c.b16 %v1128, %v1127
        %v1240 = vpack.c.b16 %v1130, %v1129
        %v1241 = vpack.c.b16 %v1132, %v1131
        %v1242 = vpack.c.b16 %v1134, %v1133
        %v1243 = vpack.c.b16 %v1136, %v1135
        %v1244 = vpack.c.b16 %v1138, %v1137
        %v1245 = vpack.c.b16 %v1140, %v1139
        %v1246 = vpack.c.b16 %v1142, %v1141
        %v1247 = vpack.c.b16 %v1144, %v1143
        %v1248 = vpack.c.b16 %v1146, %v1145
        %v1249 = vpack.c.b16 %v1148, %v1147
        %v1250 = vpack.c.b16 %v1150, %v1149
        %v1251 = vpack.c.b16 %v1152, %v1151
        %v1252 = vpack.c.b16 %v1154, %v1153
        %v1253 = vpack.c.b16 %v1156, %v1155
        %v1254 = vpack.c.b16 %v1158, %v1157
        %v1255 = vpack.c.b16 %v1160, %v1159
        %v1256 = vpack.c.b16 %v1162, %v1161
        %v1257 = vpack.c.b16 %v1164, %v1163
        %v1258 = vpack.c.b16 %v1166, %v1165
        %v1259 = vpack.c.b16 %v1168, %v1167
        %v1260 = vpack.c.b16 %v1170, %v1169
        %v1261 = vpack.c.b16 %v1172, %v1171
        %v1262 = vpack.c.b16 %v1174, %v1173
        %v1263 = vpack.c.b16 %v1176, %v1175
        %v1264 = vpack.c.b16 %v1178, %v1177
        %v1265 = vpack.c.b16 %v1180, %v1179
        %v1266 = vpack.c.b16 %v1182, %v1181
        %v1267 = vpack.c.b16 %v1184, %v1183
        %v1268 = vpack.c.b16 %v1186, %v1185
        %v1269 = vpack.c.b16 %v1188, %v1187
        %v1270 = vpack.c.b16 %v1190, %v1189
        %v1271 = vpack.c.b16 %v1192, %v1191
        %v1272 = vpack.c.b16 %v1194, %v1193
        %v1273 = vpack.c.b16 %v1196, %v1195
        %v1274 = vpack.c.b16 %v1198, %v1197
        %v1275 = vpack.c.b16 %v1200, %v1199
        %v1276 = vpack.c.b16 %v1202, %v1201
        %v1277 = vpack.c.b16 %v1204, %v1203
        %v1278 = vpack.c.b16 %v1206, %v1205
        %1351 = vmatprep.subr.bf16.mxu0 0
        %1352 = vmatpush1.bf16.msra.mxu0 %v1214
        %1353 = vmatprep.subr.bf16.mxu0 0
        %1354 = vmatpush1.bf16.msra.mxu0 %v1213
        %1355 = vmatprep.subr.bf16.mxu0 0
        %1356 = vmatpush1.bf16.msra.mxu0 %v1212
        %1357 = vmatprep.subr.bf16.mxu0 0
        %1358 = vmatpush1.bf16.msra.mxu0 %v1211
        %1359 = vmatprep.subr.bf16.mxu0 0
        %1360 = vmatpush1.bf16.msra.mxu0 %v1210
        %1361 = vmatprep.subr.bf16.mxu0 0
        %1362 = vmatpush1.bf16.msra.mxu0 %v1209
        %1363 = vmatprep.subr.bf16.mxu0 0
        %1364 = vmatpush1.bf16.msra.mxu0 %v1208
        %1365 = vmatprep.subr.bf16.mxu0 0
        %1366 = vmatpush1.bf16.msra.mxu0 %v1207
        %1367 = vmatprep.subr.bf16.mxu0 0
        %1368 = vmatpush2.bf16.msra.mxu0 %v1222
        %1369 = vmatprep.subr.bf16.mxu0 0
        %1370 = vmatpush2.bf16.msra.mxu0 %v1221
        %1371 = vmatprep.subr.bf16.mxu0 0
        %1372 = vmatpush2.bf16.msra.mxu0 %v1220
        %1373 = vmatprep.subr.bf16.mxu0 0
        %1374 = vmatpush2.bf16.msra.mxu0 %v1219
        %1375 = vmatprep.subr.bf16.mxu0 0
        %1376 = vmatpush2.bf16.msra.mxu0 %v1218
        %1377 = vmatprep.subr.bf16.mxu0 0
        %1378 = vmatpush2.bf16.msra.mxu0 %v1217
        %1379 = vmatprep.subr.bf16.mxu0 0
        %1380 = vmatpush2.bf16.msra.mxu0 %v1216
        %1381 = vmatprep.subr.bf16.mxu0 0
        %1382 = vmatpush2.bf16.msra.mxu0 %v1215
        %1383 = vmatprep.mubr.bf16.mxu0 %v721
        %1384 = vmatmul.mubr.bf16.gmra.mxu0 %v720
        %v1385 = vpop.f32.mrf.mxu0
        %v1386 = vadd.f32 %v917, %v1385
        %v1387 = vpop.f32.mrf.mxu0
        %v1388 = vpop.f32.mrf.mxu0
        %v1389 = vadd.f32 %v917, %v1388
        %v1390 = vpop.f32.mrf.mxu0
        %1391 = vmatprep.mubr.bf16.mxu0 %v724
        %1392 = vmatmul.mubr.bf16.gmra.mxu0 %v723
        %v1393 = vpop.f32.mrf.mxu0
        %v1394 = vadd.f32 %v917, %v1393
        %v1395 = vpop.f32.mrf.mxu0
        %v1396 = vpop.f32.mrf.mxu0
        %v1397 = vadd.f32 %v917, %v1396
        %v1398 = vpop.f32.mrf.mxu0
        %1399 = vmatprep.mubr.bf16.mxu0 %v721
        %1400 = vmatmul.mubr.bf16.gmra.mxu0 %v720
        %v1401 = vpop.f32.mrf.mxu0
        %v1402 = vadd.f32 %v917, %v1401
        %v1403 = vpop.f32.mrf.mxu0
        %v1404 = vpop.f32.mrf.mxu0
        %v1405 = vadd.f32 %v917, %v1404
        %v1406 = vpop.f32.mrf.mxu0
        %1407 = vmatprep.mubr.bf16.mxu0 %v727
        %1408 = vmatmul.mubr.bf16.gmra.mxu0 %v726
        %v1409 = vpop.f32.mrf.mxu0
        %v1410 = vadd.f32 %v917, %v1409
        %v1411 = vpop.f32.mrf.mxu0
        %v1412 = vpop.f32.mrf.mxu0
        %v1413 = vadd.f32 %v917, %v1412
        %v1414 = vpop.f32.mrf.mxu0
        %1415 = vmatprep.mubr.bf16.mxu0 %v730
        %1416 = vmatmul.mubr.bf16.gmra.mxu0 %v729
        %v1417 = vpop.f32.mrf.mxu0
        %v1418 = vadd.f32 %v917, %v1417
        %v1419 = vpop.f32.mrf.mxu0
        %v1420 = vpop.f32.mrf.mxu0
        %v1421 = vadd.f32 %v917, %v1420
        %v1422 = vpop.f32.mrf.mxu0
        %1423 = vmatprep.mubr.bf16.mxu0 %v733
        %1424 = vmatmul.mubr.bf16.gmra.mxu0 %v732
        %v1425 = vpop.f32.mrf.mxu0
        %v1426 = vadd.f32 %v917, %v1425
        %v1427 = vpop.f32.mrf.mxu0
        %v1428 = vpop.f32.mrf.mxu0
        %v1429 = vadd.f32 %v917, %v1428
        %v1430 = vpop.f32.mrf.mxu0
        %1431 = vmatprep.mubr.bf16.mxu0 %v736
        %1432 = vmatmul.mubr.bf16.gmra.mxu0 %v735
        %v1433 = vpop.f32.mrf.mxu0
        %v1434 = vadd.f32 %v917, %v1433
        %v1435 = vpop.f32.mrf.mxu0
        %v1436 = vpop.f32.mrf.mxu0
        %v1437 = vadd.f32 %v917, %v1436
        %v1438 = vpop.f32.mrf.mxu0
        %1439 = vmatprep.mubr.bf16.mxu0 %v739
        %1440 = vmatmul.mubr.bf16.gmra.mxu0 %v738
        %v1441 = vpop.f32.mrf.mxu0
        %v1442 = vadd.f32 %v917, %v1441
        %v1443 = vpop.f32.mrf.mxu0
        %v1444 = vpop.f32.mrf.mxu0
        %v1445 = vadd.f32 %v917, %v1444
        %v1446 = vpop.f32.mrf.mxu0
        %1447 = vmatprep.mubr.bf16.mxu0 %v742
        %1448 = vmatmul.mubr.bf16.gmra.mxu0 %v741
        %v1449 = vpop.f32.mrf.mxu0
        %v1450 = vadd.f32 %v917, %v1449
        %v1451 = vpop.f32.mrf.mxu0
        %v1452 = vpop.f32.mrf.mxu0
        %v1453 = vadd.f32 %v917, %v1452
        %v1454 = vpop.f32.mrf.mxu0
        %1455 = vmatprep.mubr.bf16.mxu0 %v745
        %1456 = vmatmul.mubr.bf16.gmra.mxu0 %v744
        %v1457 = vpop.f32.mrf.mxu0
        %v1458 = vadd.f32 %v917, %v1457
        %v1459 = vpop.f32.mrf.mxu0
        %v1460 = vpop.f32.mrf.mxu0
        %v1461 = vadd.f32 %v917, %v1460
        %v1462 = vpop.f32.mrf.mxu0
        %1463 = vmatprep.mubr.bf16.mxu0 %v748
        %1464 = vmatmul.mubr.bf16.gmra.mxu0 %v747
        %v1465 = vpop.f32.mrf.mxu0
        %v1466 = vadd.f32 %v917, %v1465
        %v1467 = vpop.f32.mrf.mxu0
        %v1468 = vpop.f32.mrf.mxu0
        %v1469 = vadd.f32 %v917, %v1468
        %v1470 = vpop.f32.mrf.mxu0
        %1471 = vmatprep.mubr.bf16.mxu0 %v751
        %1472 = vmatmul.mubr.bf16.gmra.mxu0 %v750
        %v1473 = vpop.f32.mrf.mxu0
        %v1474 = vadd.f32 %v917, %v1473
        %v1475 = vpop.f32.mrf.mxu0
        %v1476 = vpop.f32.mrf.mxu0
        %v1477 = vadd.f32 %v917, %v1476
        %v1478 = vpop.f32.mrf.mxu0
        %1479 = vmatprep.mubr.bf16.mxu0 %v754
        %1480 = vmatmul.mubr.bf16.gmra.mxu0 %v753
        %v1481 = vpop.f32.mrf.mxu0
        %v1482 = vadd.f32 %v917, %v1481
        %v1483 = vpop.f32.mrf.mxu0
        %v1484 = vpop.f32.mrf.mxu0
        %v1485 = vadd.f32 %v917, %v1484
        %v1486 = vpop.f32.mrf.mxu0
        %1487 = vmatprep.mubr.bf16.mxu0 %v757
        %1488 = vmatmul.mubr.bf16.gmra.mxu0 %v756
        %v1489 = vpop.f32.mrf.mxu0
        %v1490 = vadd.f32 %v917, %v1489
        %v1491 = vpop.f32.mrf.mxu0
        %v1492 = vpop.f32.mrf.mxu0
        %v1493 = vadd.f32 %v917, %v1492
        %v1494 = vpop.f32.mrf.mxu0
        %1495 = vmatprep.mubr.bf16.mxu0 %v760
        %1496 = vmatmul.mubr.bf16.gmra.mxu0 %v759
        %v1497 = vpop.f32.mrf.mxu0
        %v1498 = vadd.f32 %v917, %v1497
        %v1499 = vpop.f32.mrf.mxu0
        %v1500 = vpop.f32.mrf.mxu0
        %v1501 = vadd.f32 %v917, %v1500
        %v1502 = vpop.f32.mrf.mxu0
        %1503 = vmatprep.mubr.bf16.mxu0 %v763
        %1504 = vmatmul.mubr.bf16.gmra.mxu0 %v762
        %v1505 = vpop.f32.mrf.mxu0
        %v1506 = vadd.f32 %v917, %v1505
        %v1507 = vpop.f32.mrf.mxu0
        %v1508 = vpop.f32.mrf.mxu0
        %v1509 = vadd.f32 %v917, %v1508
        %v1510 = vpop.f32.mrf.mxu0
        %1511 = vdwg.mxu0
        %1512 = vmatprep.subr.bf16.mxu0 0
        %1513 = vmatpush1.bf16.msra.mxu0 %v1230
        %1514 = vmatprep.subr.bf16.mxu0 0
        %1515 = vmatpush1.bf16.msra.mxu0 %v1229
        %1516 = vmatprep.subr.bf16.mxu0 0
        %1517 = vmatpush1.bf16.msra.mxu0 %v1228
        %1518 = vmatprep.subr.bf16.mxu0 0
        %1519 = vmatpush1.bf16.msra.mxu0 %v1227
        %1520 = vmatprep.subr.bf16.mxu0 0
        %1521 = vmatpush1.bf16.msra.mxu0 %v1226
        %1522 = vmatprep.subr.bf16.mxu0 0
        %1523 = vmatpush1.bf16.msra.mxu0 %v1225
        %1524 = vmatprep.subr.bf16.mxu0 0
        %1525 = vmatpush1.bf16.msra.mxu0 %v1224
        %1526 = vmatprep.subr.bf16.mxu0 0
        %1527 = vmatpush1.bf16.msra.mxu0 %v1223
        %1528 = vmatprep.subr.bf16.mxu0 0
        %1529 = vmatpush2.bf16.msra.mxu0 %v1238
        %1530 = vmatprep.subr.bf16.mxu0 0
        %1531 = vmatpush2.bf16.msra.mxu0 %v1237
        %1532 = vmatprep.subr.bf16.mxu0 0
        %1533 = vmatpush2.bf16.msra.mxu0 %v1236
        %1534 = vmatprep.subr.bf16.mxu0 0
        %1535 = vmatpush2.bf16.msra.mxu0 %v1235
        %1536 = vmatprep.subr.bf16.mxu0 0
        %1537 = vmatpush2.bf16.msra.mxu0 %v1234
        %1538 = vmatprep.subr.bf16.mxu0 0
        %1539 = vmatpush2.bf16.msra.mxu0 %v1233
        %1540 = vmatprep.subr.bf16.mxu0 0
        %1541 = vmatpush2.bf16.msra.mxu0 %v1232
        %1542 = vmatprep.subr.bf16.mxu0 0
        %1543 = vmatpush2.bf16.msra.mxu0 %v1231
        %1544 = vmatprep.mubr.bf16.mxu0 %v723
        %1545 = vmatmul.mubr.bf16.gmra.mxu0 %v722
        %v1546 = vpop.f32.mrf.mxu0
        %v1547 = vadd.f32 %v1386, %v1546
        %v1548 = vpop.f32.mrf.mxu0
        %v1549 = vpop.f32.mrf.mxu0
        %v1550 = vadd.f32 %v1389, %v1549
        %v1551 = vpop.f32.mrf.mxu0
        %1552 = vmatprep.mubr.bf16.mxu0 %v720
        %1553 = vmatmul.mubr.bf16.gmra.mxu0 %v725
        %v1554 = vpop.f32.mrf.mxu0
        %v1555 = vadd.f32 %v1394, %v1554
        %v1556 = vpop.f32.mrf.mxu0
        %v1557 = vpop.f32.mrf.mxu0
        %v1558 = vadd.f32 %v1397, %v1557
        %v1559 = vpop.f32.mrf.mxu0
        %1560 = vmatprep.mubr.bf16.mxu0 %v726
        %1561 = vmatmul.mubr.bf16.gmra.mxu0 %v722
        %v1562 = vpop.f32.mrf.mxu0
        %v1563 = vadd.f32 %v1402, %v1562
        %v1564 = vpop.f32.mrf.mxu0
        %v1565 = vpop.f32.mrf.mxu0
        %v1566 = vadd.f32 %v1405, %v1565
        %v1567 = vpop.f32.mrf.mxu0
        %1568 = vmatprep.mubr.bf16.mxu0 %v729
        %1569 = vmatmul.mubr.bf16.gmra.mxu0 %v728
        %v1570 = vpop.f32.mrf.mxu0
        %v1571 = vadd.f32 %v1410, %v1570
        %v1572 = vpop.f32.mrf.mxu0
        %v1573 = vpop.f32.mrf.mxu0
        %v1574 = vadd.f32 %v1413, %v1573
        %v1575 = vpop.f32.mrf.mxu0
        %1576 = vmatprep.mubr.bf16.mxu0 %v732
        %1577 = vmatmul.mubr.bf16.gmra.mxu0 %v731
        %v1578 = vpop.f32.mrf.mxu0
        %v1579 = vadd.f32 %v1418, %v1578
        %v1580 = vpop.f32.mrf.mxu0
        %v1581 = vpop.f32.mrf.mxu0
        %v1582 = vadd.f32 %v1421, %v1581
        %v1583 = vpop.f32.mrf.mxu0
        %1584 = vmatprep.mubr.bf16.mxu0 %v735
        %1585 = vmatmul.mubr.bf16.gmra.mxu0 %v734
        %v1586 = vpop.f32.mrf.mxu0
        %v1587 = vadd.f32 %v1426, %v1586
        %v1588 = vpop.f32.mrf.mxu0
        %v1589 = vpop.f32.mrf.mxu0
        %v1590 = vadd.f32 %v1429, %v1589
        %v1591 = vpop.f32.mrf.mxu0
        %1592 = vmatprep.mubr.bf16.mxu0 %v738
        %1593 = vmatmul.mubr.bf16.gmra.mxu0 %v737
        %v1594 = vpop.f32.mrf.mxu0
        %v1595 = vadd.f32 %v1434, %v1594
        %v1596 = vpop.f32.mrf.mxu0
        %v1597 = vpop.f32.mrf.mxu0
        %v1598 = vadd.f32 %v1437, %v1597
        %v1599 = vpop.f32.mrf.mxu0
        %1600 = vmatprep.mubr.bf16.mxu0 %v741
        %1601 = vmatmul.mubr.bf16.gmra.mxu0 %v740
        %v1602 = vpop.f32.mrf.mxu0
        %v1603 = vadd.f32 %v1442, %v1602
        %v1604 = vpop.f32.mrf.mxu0
        %v1605 = vpop.f32.mrf.mxu0
        %v1606 = vadd.f32 %v1445, %v1605
        %v1607 = vpop.f32.mrf.mxu0
        %1608 = vmatprep.mubr.bf16.mxu0 %v744
        %1609 = vmatmul.mubr.bf16.gmra.mxu0 %v743
        %v1610 = vpop.f32.mrf.mxu0
        %v1611 = vadd.f32 %v1450, %v1610
        %v1612 = vpop.f32.mrf.mxu0
        %v1613 = vpop.f32.mrf.mxu0
        %v1614 = vadd.f32 %v1453, %v1613
        %v1615 = vpop.f32.mrf.mxu0
        %1616 = vmatprep.mubr.bf16.mxu0 %v747
        %1617 = vmatmul.mubr.bf16.gmra.mxu0 %v746
        %v1618 = vpop.f32.mrf.mxu0
        %v1619 = vadd.f32 %v1458, %v1618
        %v1620 = vpop.f32.mrf.mxu0
        %v1621 = vpop.f32.mrf.mxu0
        %v1622 = vadd.f32 %v1461, %v1621
        %v1623 = vpop.f32.mrf.mxu0
        %1624 = vmatprep.mubr.bf16.mxu0 %v750
        %1625 = vmatmul.mubr.bf16.gmra.mxu0 %v749
        %v1626 = vpop.f32.mrf.mxu0
        %v1627 = vadd.f32 %v1466, %v1626
        %v1628 = vpop.f32.mrf.mxu0
        %v1629 = vpop.f32.mrf.mxu0
        %v1630 = vadd.f32 %v1469, %v1629
        %v1631 = vpop.f32.mrf.mxu0
        %1632 = vmatprep.mubr.bf16.mxu0 %v753
        %1633 = vmatmul.mubr.bf16.gmra.mxu0 %v752
        %v1634 = vpop.f32.mrf.mxu0
        %v1635 = vadd.f32 %v1474, %v1634
        %v1636 = vpop.f32.mrf.mxu0
        %v1637 = vpop.f32.mrf.mxu0
        %v1638 = vadd.f32 %v1477, %v1637
        %v1639 = vpop.f32.mrf.mxu0
        %1640 = vmatprep.mubr.bf16.mxu0 %v756
        %1641 = vmatmul.mubr.bf16.gmra.mxu0 %v755
        %v1642 = vpop.f32.mrf.mxu0
        %v1643 = vadd.f32 %v1482, %v1642
        %v1644 = vpop.f32.mrf.mxu0
        %v1645 = vpop.f32.mrf.mxu0
        %v1646 = vadd.f32 %v1485, %v1645
        %v1647 = vpop.f32.mrf.mxu0
        %1648 = vmatprep.mubr.bf16.mxu0 %v759
        %1649 = vmatmul.mubr.bf16.gmra.mxu0 %v758
        %v1650 = vpop.f32.mrf.mxu0
        %v1651 = vadd.f32 %v1490, %v1650
        %v1652 = vpop.f32.mrf.mxu0
        %v1653 = vpop.f32.mrf.mxu0
        %v1654 = vadd.f32 %v1493, %v1653
        %v1655 = vpop.f32.mrf.mxu0
        %1656 = vmatprep.mubr.bf16.mxu0 %v762
        %1657 = vmatmul.mubr.bf16.gmra.mxu0 %v761
        %v1658 = vpop.f32.mrf.mxu0
        %v1659 = vadd.f32 %v1498, %v1658
        %v1660 = vpop.f32.mrf.mxu0
        %v1661 = vpop.f32.mrf.mxu0
        %v1662 = vadd.f32 %v1501, %v1661
        %v1663 = vpop.f32.mrf.mxu0
        %1664 = vmatprep.mubr.bf16.mxu0 %v765
        %1665 = vmatmul.mubr.bf16.gmra.mxu0 %v764
        %v1666 = vpop.f32.mrf.mxu0
        %v1667 = vadd.f32 %v1506, %v1666
        %v1668 = vpop.f32.mrf.mxu0
        %v1669 = vpop.f32.mrf.mxu0
        %v1670 = vadd.f32 %v1509, %v1669
        %v1671 = vpop.f32.mrf.mxu0
        %1672 = vdwg.mxu0
        %1673 = vmatprep.subr.bf16.mxu0 0
        %1674 = vmatpush1.bf16.msra.mxu0 %v1246
        %1675 = vmatprep.subr.bf16.mxu0 0
        %1676 = vmatpush1.bf16.msra.mxu0 %v1245
        %1677 = vmatprep.subr.bf16.mxu0 0
        %1678 = vmatpush1.bf16.msra.mxu0 %v1244
        %1679 = vmatprep.subr.bf16.mxu0 0
        %1680 = vmatpush1.bf16.msra.mxu0 %v1243
        %1681 = vmatprep.subr.bf16.mxu0 0
        %1682 = vmatpush1.bf16.msra.mxu0 %v1242
        %1683 = vmatprep.subr.bf16.mxu0 0
        %1684 = vmatpush1.bf16.msra.mxu0 %v1241
        %1685 = vmatprep.subr.bf16.mxu0 0
        %1686 = vmatpush1.bf16.msra.mxu0 %v1240
        %1687 = vmatprep.subr.bf16.mxu0 0
        %1688 = vmatpush1.bf16.msra.mxu0 %v1239
        %1689 = vmatprep.subr.bf16.mxu0 0
        %1690 = vmatpush2.bf16.msra.mxu0 %v1254
        %1691 = vmatprep.subr.bf16.mxu0 0
        %1692 = vmatpush2.bf16.msra.mxu0 %v1253
        %1693 = vmatprep.subr.bf16.mxu0 0
        %1694 = vmatpush2.bf16.msra.mxu0 %v1252
        %1695 = vmatprep.subr.bf16.mxu0 0
        %1696 = vmatpush2.bf16.msra.mxu0 %v1251
        %1697 = vmatprep.subr.bf16.mxu0 0
        %1698 = vmatpush2.bf16.msra.mxu0 %v1250
        %1699 = vmatprep.subr.bf16.mxu0 0
        %1700 = vmatpush2.bf16.msra.mxu0 %v1249
        %1701 = vmatprep.subr.bf16.mxu0 0
        %1702 = vmatpush2.bf16.msra.mxu0 %v1248
        %1703 = vmatprep.subr.bf16.mxu0 0
        %1704 = vmatpush2.bf16.msra.mxu0 %v1247
        %1705 = vmatprep.mubr.bf16.mxu0 %v725
        %1706 = vmatmul.mubr.bf16.gmra.mxu0 %v724
        %v1707 = vpop.f32.mrf.mxu0
        %v1708 = vadd.f32 %v1547, %v1707
        %v1709 = vpop.f32.mrf.mxu0
        %v1710 = vpop.f32.mrf.mxu0
        %v1711 = vadd.f32 %v1550, %v1710
        %v1712 = vpop.f32.mrf.mxu0
        %1713 = vmatprep.mubr.bf16.mxu0 %v722
        %1714 = vmatmul.mubr.bf16.gmra.mxu0 %v721
        %v1715 = vpop.f32.mrf.mxu0
        %v1716 = vadd.f32 %v1555, %v1715
        %v1717 = vpop.f32.mrf.mxu0
        %v1718 = vpop.f32.mrf.mxu0
        %v1719 = vadd.f32 %v1558, %v1718
        %v1720 = vpop.f32.mrf.mxu0
        %1721 = vmatprep.mubr.bf16.mxu0 %v728
        %1722 = vmatmul.mubr.bf16.gmra.mxu0 %v727
        %v1723 = vpop.f32.mrf.mxu0
        %v1724 = vadd.f32 %v1563, %v1723
        %v1725 = vpop.f32.mrf.mxu0
        %v1726 = vpop.f32.mrf.mxu0
        %v1727 = vadd.f32 %v1566, %v1726
        %v1728 = vpop.f32.mrf.mxu0
        %1729 = vmatprep.mubr.bf16.mxu0 %v731
        %1730 = vmatmul.mubr.bf16.gmra.mxu0 %v730
        %v1731 = vpop.f32.mrf.mxu0
        %v1732 = vadd.f32 %v1571, %v1731
        %v1733 = vpop.f32.mrf.mxu0
        %v1734 = vpop.f32.mrf.mxu0
        %v1735 = vadd.f32 %v1574, %v1734
        %v1736 = vpop.f32.mrf.mxu0
        %1737 = vmatprep.mubr.bf16.mxu0 %v734
        %1738 = vmatmul.mubr.bf16.gmra.mxu0 %v733
        %v1739 = vpop.f32.mrf.mxu0
        %v1740 = vadd.f32 %v1579, %v1739
        %v1741 = vpop.f32.mrf.mxu0
        %v1742 = vpop.f32.mrf.mxu0
        %v1743 = vadd.f32 %v1582, %v1742
        %v1744 = vpop.f32.mrf.mxu0
        %1745 = vmatprep.mubr.bf16.mxu0 %v737
        %1746 = vmatmul.mubr.bf16.gmra.mxu0 %v736
        %v1747 = vpop.f32.mrf.mxu0
        %v1748 = vadd.f32 %v1587, %v1747
        %v1749 = vpop.f32.mrf.mxu0
        %v1750 = vpop.f32.mrf.mxu0
        %v1751 = vadd.f32 %v1590, %v1750
        %v1752 = vpop.f32.mrf.mxu0
        %1753 = vmatprep.mubr.bf16.mxu0 %v740
        %1754 = vmatmul.mubr.bf16.gmra.mxu0 %v739
        %v1755 = vpop.f32.mrf.mxu0
        %v1756 = vadd.f32 %v1595, %v1755
        %v1757 = vpop.f32.mrf.mxu0
        %v1758 = vpop.f32.mrf.mxu0
        %v1759 = vadd.f32 %v1598, %v1758
        %v1760 = vpop.f32.mrf.mxu0
        %1761 = vmatprep.mubr.bf16.mxu0 %v743
        %1762 = vmatmul.mubr.bf16.gmra.mxu0 %v742
        %v1763 = vpop.f32.mrf.mxu0
        %v1764 = vadd.f32 %v1603, %v1763
        %v1765 = vpop.f32.mrf.mxu0
        %v1766 = vpop.f32.mrf.mxu0
        %v1767 = vadd.f32 %v1606, %v1766
        %v1768 = vpop.f32.mrf.mxu0
        %1769 = vmatprep.mubr.bf16.mxu0 %v746
        %1770 = vmatmul.mubr.bf16.gmra.mxu0 %v745
        %v1771 = vpop.f32.mrf.mxu0
        %v1772 = vadd.f32 %v1611, %v1771
        %v1773 = vpop.f32.mrf.mxu0
        %v1774 = vpop.f32.mrf.mxu0
        %v1775 = vadd.f32 %v1614, %v1774
        %v1776 = vpop.f32.mrf.mxu0
        %1777 = vmatprep.mubr.bf16.mxu0 %v749
        %1778 = vmatmul.mubr.bf16.gmra.mxu0 %v748
        %v1779 = vpop.f32.mrf.mxu0
        %v1780 = vadd.f32 %v1619, %v1779
        %v1781 = vpop.f32.mrf.mxu0
        %v1782 = vpop.f32.mrf.mxu0
        %v1783 = vadd.f32 %v1622, %v1782
        %v1784 = vpop.f32.mrf.mxu0
        %1785 = vmatprep.mubr.bf16.mxu0 %v752
        %1786 = vmatmul.mubr.bf16.gmra.mxu0 %v751
        %v1787 = vpop.f32.mrf.mxu0
        %v1788 = vadd.f32 %v1627, %v1787
        %v1789 = vpop.f32.mrf.mxu0
        %v1790 = vpop.f32.mrf.mxu0
        %v1791 = vadd.f32 %v1630, %v1790
        %v1792 = vpop.f32.mrf.mxu0
        %1793 = vmatprep.mubr.bf16.mxu0 %v755
        %1794 = vmatmul.mubr.bf16.gmra.mxu0 %v754
        %v1795 = vpop.f32.mrf.mxu0
        %v1796 = vadd.f32 %v1635, %v1795
        %v1797 = vpop.f32.mrf.mxu0
        %v1798 = vpop.f32.mrf.mxu0
        %v1799 = vadd.f32 %v1638, %v1798
        %v1800 = vpop.f32.mrf.mxu0
        %1801 = vmatprep.mubr.bf16.mxu0 %v758
        %1802 = vmatmul.mubr.bf16.gmra.mxu0 %v757
        %v1803 = vpop.f32.mrf.mxu0
        %v1804 = vadd.f32 %v1643, %v1803
        %v1805 = vpop.f32.mrf.mxu0
        %v1806 = vpop.f32.mrf.mxu0
        %v1807 = vadd.f32 %v1646, %v1806
        %v1808 = vpop.f32.mrf.mxu0
        %1809 = vmatprep.mubr.bf16.mxu0 %v761
        %1810 = vmatmul.mubr.bf16.gmra.mxu0 %v760
        %v1811 = vpop.f32.mrf.mxu0
        %v1812 = vadd.f32 %v1651, %v1811
        %v1813 = vpop.f32.mrf.mxu0
        %v1814 = vpop.f32.mrf.mxu0
        %v1815 = vadd.f32 %v1654, %v1814
        %v1816 = vpop.f32.mrf.mxu0
        %1817 = vmatprep.mubr.bf16.mxu0 %v764
        %1818 = vmatmul.mubr.bf16.gmra.mxu0 %v763
        %v1819 = vpop.f32.mrf.mxu0
        %v1820 = vadd.f32 %v1659, %v1819
        %v1821 = vpop.f32.mrf.mxu0
        %v1822 = vpop.f32.mrf.mxu0
        %v1823 = vadd.f32 %v1662, %v1822
        %v1824 = vpop.f32.mrf.mxu0
        %1825 = vmatprep.mubr.bf16.mxu0 %v767
        %1826 = vmatmul.mubr.bf16.gmra.mxu0 %v766
        %v1827 = vpop.f32.mrf.mxu0
        %v1828 = vadd.f32 %v1667, %v1827
        %v1829 = vpop.f32.mrf.mxu0
        %v1830 = vpop.f32.mrf.mxu0
        %v1831 = vadd.f32 %v1670, %v1830
        %v1832 = vpop.f32.mrf.mxu0
        %1833 = vdwg.mxu0
        %1834 = vmatprep.subr.bf16.mxu0 0
        %1835 = vmatpush1.bf16.msra.mxu0 %v1262
        %1836 = vmatprep.subr.bf16.mxu0 0
        %1837 = vmatpush1.bf16.msra.mxu0 %v1261
        %1838 = vmatprep.subr.bf16.mxu0 0
        %1839 = vmatpush1.bf16.msra.mxu0 %v1260
        %1840 = vmatprep.subr.bf16.mxu0 0
        %1841 = vmatpush1.bf16.msra.mxu0 %v1259
        %1842 = vmatprep.subr.bf16.mxu0 0
        %1843 = vmatpush1.bf16.msra.mxu0 %v1258
        %1844 = vmatprep.subr.bf16.mxu0 0
        %1845 = vmatpush1.bf16.msra.mxu0 %v1257
        %1846 = vmatprep.subr.bf16.mxu0 0
        %1847 = vmatpush1.bf16.msra.mxu0 %v1256
        %1848 = vmatprep.subr.bf16.mxu0 0
        %1849 = vmatpush1.bf16.msra.mxu0 %v1255
        %1850 = vmatprep.subr.bf16.mxu0 0
        %1851 = vmatpush2.bf16.msra.mxu0 %v1270
        %1852 = vmatprep.subr.bf16.mxu0 0
        %1853 = vmatpush2.bf16.msra.mxu0 %v1269
        %1854 = vmatprep.subr.bf16.mxu0 0
        %1855 = vmatpush2.bf16.msra.mxu0 %v1268
        %1856 = vmatprep.subr.bf16.mxu0 0
        %1857 = vmatpush2.bf16.msra.mxu0 %v1267
        %1858 = vmatprep.subr.bf16.mxu0 0
        %1859 = vmatpush2.bf16.msra.mxu0 %v1266
        %1860 = vmatprep.subr.bf16.mxu0 0
        %1861 = vmatpush2.bf16.msra.mxu0 %v1265
        %1862 = vmatprep.subr.bf16.mxu0 0
        %1863 = vmatpush2.bf16.msra.mxu0 %v1264
        %1864 = vmatprep.subr.bf16.mxu0 0
        %1865 = vmatpush2.bf16.msra.mxu0 %v1263
        %1866 = vmatprep.mubr.bf16.mxu0 %v721
        %1867 = vmatmul.mubr.bf16.gmra.mxu0 %v720
        %v1868 = vpop.f32.mrf.mxu0
        %v1869 = vadd.f32 %v1708, %v1868
        %v1870 = vpop.f32.mrf.mxu0
        %v1871 = vpop.f32.mrf.mxu0
        %v1872 = vadd.f32 %v1711, %v1871
        %v1873 = vpop.f32.mrf.mxu0
        %1874 = vmatprep.mubr.bf16.mxu0 %v727
        %1875 = vmatmul.mubr.bf16.gmra.mxu0 %v726
        %v1876 = vpop.f32.mrf.mxu0
        %v1877 = vadd.f32 %v1716, %v1876
        %v1878 = vpop.f32.mrf.mxu0
        %v1879 = vpop.f32.mrf.mxu0
        %v1880 = vadd.f32 %v1719, %v1879
        %v1881 = vpop.f32.mrf.mxu0
        %1882 = vmatprep.mubr.bf16.mxu0 %v730
        %1883 = vmatmul.mubr.bf16.gmra.mxu0 %v729
        %v1884 = vpop.f32.mrf.mxu0
        %v1885 = vadd.f32 %v1724, %v1884
        %v1886 = vpop.f32.mrf.mxu0
        %v1887 = vpop.f32.mrf.mxu0
        %v1888 = vadd.f32 %v1727, %v1887
        %v1889 = vpop.f32.mrf.mxu0
        %1890 = vmatprep.mubr.bf16.mxu0 %v733
        %1891 = vmatmul.mubr.bf16.gmra.mxu0 %v732
        %v1892 = vpop.f32.mrf.mxu0
        %v1893 = vadd.f32 %v1732, %v1892
        %v1894 = vpop.f32.mrf.mxu0
        %v1895 = vpop.f32.mrf.mxu0
        %v1896 = vadd.f32 %v1735, %v1895
        %v1897 = vpop.f32.mrf.mxu0
        %1898 = vmatprep.mubr.bf16.mxu0 %v736
        %1899 = vmatmul.mubr.bf16.gmra.mxu0 %v735
        %v1900 = vpop.f32.mrf.mxu0
        %v1901 = vadd.f32 %v1740, %v1900
        %v1902 = vpop.f32.mrf.mxu0
        %v1903 = vpop.f32.mrf.mxu0
        %v1904 = vadd.f32 %v1743, %v1903
        %v1905 = vpop.f32.mrf.mxu0
        %1906 = vmatprep.mubr.bf16.mxu0 %v739
        %1907 = vmatmul.mubr.bf16.gmra.mxu0 %v738
        %v1908 = vpop.f32.mrf.mxu0
        %v1909 = vadd.f32 %v1748, %v1908
        %v1910 = vpop.f32.mrf.mxu0
        %v1911 = vpop.f32.mrf.mxu0
        %v1912 = vadd.f32 %v1751, %v1911
        %v1913 = vpop.f32.mrf.mxu0
        %1914 = vmatprep.mubr.bf16.mxu0 %v742
        %1915 = vmatmul.mubr.bf16.gmra.mxu0 %v741
        %v1916 = vpop.f32.mrf.mxu0
        %v1917 = vadd.f32 %v1756, %v1916
        %v1918 = vpop.f32.mrf.mxu0
        %v1919 = vpop.f32.mrf.mxu0
        %v1920 = vadd.f32 %v1759, %v1919
        %v1921 = vpop.f32.mrf.mxu0
        %1922 = vmatprep.mubr.bf16.mxu0 %v745
        %1923 = vmatmul.mubr.bf16.gmra.mxu0 %v744
        %v1924 = vpop.f32.mrf.mxu0
        %v1925 = vadd.f32 %v1764, %v1924
        %v1926 = vpop.f32.mrf.mxu0
        %v1927 = vpop.f32.mrf.mxu0
        %v1928 = vadd.f32 %v1767, %v1927
        %v1929 = vpop.f32.mrf.mxu0
        %1930 = vmatprep.mubr.bf16.mxu0 %v748
        %1931 = vmatmul.mubr.bf16.gmra.mxu0 %v747
        %v1932 = vpop.f32.mrf.mxu0
        %v1933 = vadd.f32 %v1772, %v1932
        %v1934 = vpop.f32.mrf.mxu0
        %v1935 = vpop.f32.mrf.mxu0
        %v1936 = vadd.f32 %v1775, %v1935
        %v1937 = vpop.f32.mrf.mxu0
        %1938 = vmatprep.mubr.bf16.mxu0 %v751
        %1939 = vmatmul.mubr.bf16.gmra.mxu0 %v750
        %v1940 = vpop.f32.mrf.mxu0
        %v1941 = vadd.f32 %v1780, %v1940
        %v1942 = vpop.f32.mrf.mxu0
        %v1943 = vpop.f32.mrf.mxu0
        %v1944 = vadd.f32 %v1783, %v1943
        %v1945 = vpop.f32.mrf.mxu0
        %1946 = vmatprep.mubr.bf16.mxu0 %v754
        %1947 = vmatmul.mubr.bf16.gmra.mxu0 %v753
        %v1948 = vpop.f32.mrf.mxu0
        %v1949 = vadd.f32 %v1788, %v1948
        %v1950 = vpop.f32.mrf.mxu0
        %v1951 = vpop.f32.mrf.mxu0
        %v1952 = vadd.f32 %v1791, %v1951
        %v1953 = vpop.f32.mrf.mxu0
        %1954 = vmatprep.mubr.bf16.mxu0 %v757
        %1955 = vmatmul.mubr.bf16.gmra.mxu0 %v756
        %v1956 = vpop.f32.mrf.mxu0
        %v1957 = vadd.f32 %v1796, %v1956
        %v1958 = vpop.f32.mrf.mxu0
        %v1959 = vpop.f32.mrf.mxu0
        %v1960 = vadd.f32 %v1799, %v1959
        %v1961 = vpop.f32.mrf.mxu0
        %1962 = vmatprep.mubr.bf16.mxu0 %v760
        %1963 = vmatmul.mubr.bf16.gmra.mxu0 %v759
        %v1964 = vpop.f32.mrf.mxu0
        %v1965 = vadd.f32 %v1804, %v1964
        %v1966 = vpop.f32.mrf.mxu0
        %v1967 = vpop.f32.mrf.mxu0
        %v1968 = vadd.f32 %v1807, %v1967
        %v1969 = vpop.f32.mrf.mxu0
        %1970 = vmatprep.mubr.bf16.mxu0 %v763
        %1971 = vmatmul.mubr.bf16.gmra.mxu0 %v762
        %v1972 = vpop.f32.mrf.mxu0
        %v1973 = vadd.f32 %v1812, %v1972
        %v1974 = vpop.f32.mrf.mxu0
        %v1975 = vpop.f32.mrf.mxu0
        %v1976 = vadd.f32 %v1815, %v1975
        %v1977 = vpop.f32.mrf.mxu0
        %1978 = vmatprep.mubr.bf16.mxu0 %v766
        %1979 = vmatmul.mubr.bf16.gmra.mxu0 %v765
        %v1980 = vpop.f32.mrf.mxu0
        %v1981 = vadd.f32 %v1820, %v1980
        %v1982 = vpop.f32.mrf.mxu0
        %v1983 = vpop.f32.mrf.mxu0
        %v1984 = vadd.f32 %v1823, %v1983
        %v1985 = vpop.f32.mrf.mxu0
        %1986 = vmatprep.mubr.bf16.mxu0 %v763
        %1987 = vmatmul.mubr.bf16.gmra.mxu0 %v762
        %v1988 = vpop.f32.mrf.mxu0
        %v1989 = vadd.f32 %v1828, %v1988
        %v1990 = vpop.f32.mrf.mxu0
        %v1991 = vpop.f32.mrf.mxu0
        %v1992 = vadd.f32 %v1831, %v1991
        %v1993 = vpop.f32.mrf.mxu0
        %1994 = vdwg.mxu0
        %1995 = vmatprep.subr.bf16.mxu0 0
        %1996 = vmatpush1.bf16.msra.mxu0 %v1278
        %1997 = vmatprep.subr.bf16.mxu0 0
        %1998 = vmatpush1.bf16.msra.mxu0 %v1277
        %1999 = vmatprep.subr.bf16.mxu0 0
        %2000 = vmatpush1.bf16.msra.mxu0 %v1276
        %2001 = vmatprep.subr.bf16.mxu0 0
        %2002 = vmatpush1.bf16.msra.mxu0 %v1275
        %2003 = vmatprep.subr.bf16.mxu0 0
        %2004 = vmatpush1.bf16.msra.mxu0 %v1274
        %2005 = vmatprep.subr.bf16.mxu0 0
        %2006 = vmatpush1.bf16.msra.mxu0 %v1273
        %2007 = vmatprep.subr.bf16.mxu0 0
        %2008 = vmatpush1.bf16.msra.mxu0 %v1272
        %2009 = vmatprep.subr.bf16.mxu0 0
        %2010 = vmatpush1.bf16.msra.mxu0 %v1271
        %2011 = vmatprep.subr.bf16.mxu0 0
        %2012 = vmatpush2.bf16.msra.mxu0 0
        %2013 = vmatprep.subr.bf16.mxu0 0
        %2014 = vmatpush2.bf16.msra.mxu0 0
        %2015 = vmatprep.subr.bf16.mxu0 0
        %2016 = vmatpush2.bf16.msra.mxu0 0
        %2017 = vmatprep.subr.bf16.mxu0 0
        %2018 = vmatpush2.bf16.msra.mxu0 0
        %2019 = vmatprep.subr.bf16.mxu0 0
        %2020 = vmatpush2.bf16.msra.mxu0 0
        %2021 = vmatprep.subr.bf16.mxu0 0
        %2022 = vmatpush2.bf16.msra.mxu0 0
        %2023 = vmatprep.subr.bf16.mxu0 0
        %2024 = vmatpush2.bf16.msra.mxu0 0
        %2025 = vmatprep.subr.bf16.mxu0 0
        %2026 = vmatpush2.bf16.msra.mxu0 0
        %2027 = vmatprep.mubr.bf16.mxu0 0
        %2028 = vmatmul.mubr.bf16.gmra.mxu0 %v722
        %v2029 = vpop.f32.mrf.mxu0
        %v2030 = vadd.f32 %v1869, %v2029
        %v2031 = vpop.f32.mrf.mxu0
        %v2032 = vpop.f32.mrf.mxu0
        %v2033 = vadd.f32 %v1872, %v2032
        %v2034 = vpop.f32.mrf.mxu0
        %2035 = vmatprep.mubr.bf16.mxu0 0
        %2036 = vmatmul.mubr.bf16.gmra.mxu0 %v728
        %v2037 = vpop.f32.mrf.mxu0
        %v2038 = vadd.f32 %v1877, %v2037
        %v2039 = vpop.f32.mrf.mxu0
        %v2040 = vpop.f32.mrf.mxu0
        %v2041 = vadd.f32 %v1880, %v2040
        %v2042 = vpop.f32.mrf.mxu0
        %2043 = vmatprep.mubr.bf16.mxu0 0
        %2044 = vmatmul.mubr.bf16.gmra.mxu0 %v731
        %v2045 = vpop.f32.mrf.mxu0
        %v2046 = vadd.f32 %v1885, %v2045
        %v2047 = vpop.f32.mrf.mxu0
        %v2048 = vpop.f32.mrf.mxu0
        %v2049 = vadd.f32 %v1888, %v2048
        %v2050 = vpop.f32.mrf.mxu0
        %2051 = vmatprep.mubr.bf16.mxu0 0
        %2052 = vmatmul.mubr.bf16.gmra.mxu0 %v734
        %v2053 = vpop.f32.mrf.mxu0
        %v2054 = vadd.f32 %v1893, %v2053
        %v2055 = vpop.f32.mrf.mxu0
        %v2056 = vpop.f32.mrf.mxu0
        %v2057 = vadd.f32 %v1896, %v2056
        %v2058 = vpop.f32.mrf.mxu0
        %2059 = vmatprep.mubr.bf16.mxu0 0
        %2060 = vmatmul.mubr.bf16.gmra.mxu0 %v737
        %v2061 = vpop.f32.mrf.mxu0
        %v2062 = vadd.f32 %v1901, %v2061
        %v2063 = vpop.f32.mrf.mxu0
        %v2064 = vpop.f32.mrf.mxu0
        %v2065 = vadd.f32 %v1904, %v2064
        %v2066 = vpop.f32.mrf.mxu0
        %2067 = vmatprep.mubr.bf16.mxu0 0
        %2068 = vmatmul.mubr.bf16.gmra.mxu0 %v740
        %v2069 = vpop.f32.mrf.mxu0
        %v2070 = vadd.f32 %v1909, %v2069
        %v2071 = vpop.f32.mrf.mxu0
        %v2072 = vpop.f32.mrf.mxu0
        %v2073 = vadd.f32 %v1912, %v2072
        %v2074 = vpop.f32.mrf.mxu0
        %2075 = vmatprep.mubr.bf16.mxu0 0
        %2076 = vmatmul.mubr.bf16.gmra.mxu0 %v743
        %v2077 = vpop.f32.mrf.mxu0
        %v2078 = vadd.f32 %v1917, %v2077
        %v2079 = vpop.f32.mrf.mxu0
        %v2080 = vpop.f32.mrf.mxu0
        %v2081 = vadd.f32 %v1920, %v2080
        %v2082 = vpop.f32.mrf.mxu0
        %2083 = vmatprep.mubr.bf16.mxu0 0
        %2084 = vmatmul.mubr.bf16.gmra.mxu0 %v746
        %v2085 = vpop.f32.mrf.mxu0
        %v2086 = vadd.f32 %v1925, %v2085
        %v2087 = vpop.f32.mrf.mxu0
        %v2088 = vpop.f32.mrf.mxu0
        %v2089 = vadd.f32 %v1928, %v2088
        %v2090 = vpop.f32.mrf.mxu0
        %2091 = vmatprep.mubr.bf16.mxu0 0
        %2092 = vmatmul.mubr.bf16.gmra.mxu0 %v749
        %v2093 = vpop.f32.mrf.mxu0
        %v2094 = vadd.f32 %v1933, %v2093
        %v2095 = vpop.f32.mrf.mxu0
        %v2096 = vpop.f32.mrf.mxu0
        %v2097 = vadd.f32 %v1936, %v2096
        %v2098 = vpop.f32.mrf.mxu0
        %2099 = vmatprep.mubr.bf16.mxu0 0
        %2100 = vmatmul.mubr.bf16.gmra.mxu0 %v752
        %v2101 = vpop.f32.mrf.mxu0
        %v2102 = vadd.f32 %v1941, %v2101
        %v2103 = vpop.f32.mrf.mxu0
        %v2104 = vpop.f32.mrf.mxu0
        %v2105 = vadd.f32 %v1944, %v2104
        %v2106 = vpop.f32.mrf.mxu0
        %2107 = vmatprep.mubr.bf16.mxu0 0
        %2108 = vmatmul.mubr.bf16.gmra.mxu0 %v755
        %v2109 = vpop.f32.mrf.mxu0
        %v2110 = vadd.f32 %v1949, %v2109
        %v2111 = vpop.f32.mrf.mxu0
        %v2112 = vpop.f32.mrf.mxu0
        %v2113 = vadd.f32 %v1952, %v2112
        %v2114 = vpop.f32.mrf.mxu0
        %2115 = vmatprep.mubr.bf16.mxu0 0
        %2116 = vmatmul.mubr.bf16.gmra.mxu0 %v758
        %v2117 = vpop.f32.mrf.mxu0
        %v2118 = vadd.f32 %v1957, %v2117
        %v2119 = vpop.f32.mrf.mxu0
        %v2120 = vpop.f32.mrf.mxu0
        %v2121 = vadd.f32 %v1960, %v2120
        %v2122 = vpop.f32.mrf.mxu0
        %2123 = vmatprep.mubr.bf16.mxu0 0
        %2124 = vmatmul.mubr.bf16.gmra.mxu0 %v761
        %v2125 = vpop.f32.mrf.mxu0
        %v2126 = vadd.f32 %v1965, %v2125
        %v2127 = vpop.f32.mrf.mxu0
        %v2128 = vpop.f32.mrf.mxu0
        %v2129 = vadd.f32 %v1968, %v2128
        %v2130 = vpop.f32.mrf.mxu0
        %2131 = vmatprep.mubr.bf16.mxu0 0
        %2132 = vmatmul.mubr.bf16.gmra.mxu0 %v764
        %v2133 = vpop.f32.mrf.mxu0
        %v2134 = vadd.f32 %v1973, %v2133
        %v2135 = vpop.f32.mrf.mxu0
        %v2136 = vpop.f32.mrf.mxu0
        %v2137 = vadd.f32 %v1976, %v2136
        %v2138 = vpop.f32.mrf.mxu0
        %2139 = vmatprep.mubr.bf16.mxu0 0
        %2140 = vmatmul.mubr.bf16.gmra.mxu0 %v767
        %v2141 = vpop.f32.mrf.mxu0
        %v2142 = vadd.f32 %v1981, %v2141
        %v2143 = vpop.f32.mrf.mxu0
        %v2144 = vpop.f32.mrf.mxu0
        %v2145 = vadd.f32 %v1984, %v2144
        %v2146 = vpop.f32.mrf.mxu0
        %2147 = vmatprep.mubr.bf16.mxu0 0
        %2148 = vmatmul.mubr.bf16.gmra.mxu0 %v764
        %v2149 = vpop.f32.mrf.mxu0
        %v2150 = vadd.f32 %v1989, %v2149
        %v2151 = vpop.f32.mrf.mxu0
        %v2152 = vpop.f32.mrf.mxu0
        %v2153 = vadd.f32 %v1992, %v2152
        %v2154 = vpop.f32.mrf.mxu0
        %2155 = vdwg.mxu0
        %2156 = vst [vmem:[%s203] sm:$0xff] %v2030
        %2157 = vst [vmem:[%s203 + $0x8] sm:$0xff] %v2033
        %2158 = vst [vmem:[%s203 + $0x10] sm:$0xff] %v2038
        %2159 = vst [vmem:[%s203 + $0x18] sm:$0xff] %v2041
        %2160 = vst [vmem:[%s203 + $0x20] sm:$0xff] %v2046
        %2161 = vst [vmem:[%s203 + $0x28] sm:$0xff] %v2049
        %2162 = vst [vmem:[%s203 + $0x30] sm:$0xff] %v2054
        %2163 = vst [vmem:[%s203 + $0x38] sm:$0xff] %v2057
        %2164 = vst [vmem:[%s203 + $0x40] sm:$0xff] %v2062
        %2165 = vst [vmem:[%s203 + $0x48] sm:$0xff] %v2065
        %2166 = vst [vmem:[%s203 + $0x50] sm:$0xff] %v2070
        %2167 = vst [vmem:[%s203 + $0x58] sm:$0xff] %v2073
        %2168 = vst [vmem:[%s203 + $0x60] sm:$0xff] %v2078
        %2169 = vst [vmem:[%s203 + $0x68] sm:$0xff] %v2081
        %2170 = vst [vmem:[%s203 + $0x70] sm:$0xff] %v2086
        %2171 = vst [vmem:[%s203 + $0x78] sm:$0xff] %v2089
        %2172 = vst [vmem:[%s203 + $0x80] sm:$0xff] %v2094
        %2173 = vst [vmem:[%s203 + $0x88] sm:$0xff] %v2097
        %2174 = vst [vmem:[%s203 + $0x90] sm:$0xff] %v2102
        %2175 = vst [vmem:[%s203 + $0x98] sm:$0xff] %v2105
        %2176 = vst [vmem:[%s203 + $0xa0] sm:$0xff] %v2110
        %2177 = vst [vmem:[%s203 + $0xa8] sm:$0xff] %v2113
        %2178 = vst [vmem:[%s203 + $0xb0] sm:$0xff] %v2118
        %2179 = vst [vmem:[%s203 + $0xb8] sm:$0xff] %v2121
        %2180 = vst [vmem:[%s203 + $0xc0] sm:$0xff] %v2126
        %2181 = vst [vmem:[%s203 + $0xc8] sm:$0xff] %v2129
        %2182 = vst [vmem:[%s203 + $0xd0] sm:$0xff] %v2134
        %2183 = vst [vmem:[%s203 + $0xd8] sm:$0xff] %v2137
        %2184 = vst [vmem:[%s203 + $0xe0] sm:$0xff] %v2142
        %2185 = vst [vmem:[%s203 + $0xe8] sm:$0xff] %v2145
        %2186 = vst [vmem:[%s203 + $0xf0] sm:$0xff] %v2150
        %2187 = vst [vmem:[%s203 + $0xf8] sm:$0xff] %v2153
        %s2188 = sand.u32 %s97, 1
        %s2189 = scalar_lea.sflag [#allocation4], %s2188
        %s2190 = sand.u32 %s97, 1
        %s2191 = smul.addr %s2190, 256
        %s2192 = scalar_lea.vmem [#allocation7], %s2191
        // Predicated region
        $region41: #{tpu_custom_call.1} parent=31 // pred_check
          %p2193 = pneg %p107
        $region42: #{tpu_custom_call.1} parent=31 // pred_check_branch
          %2195 = sbr.rel (%p2193) target = $region44
        $region43: #{tpu_custom_call.1} parent=31 // pred_region
          %s2197 = ssub.s32 4096, 4096
          %2198 = vsyncadd %s2189, %s2197
          %s2199 = smul.addr %s21, 32
          %s2200 = smul.addr %s2199, 128
          %s2201 = scalar_lea.hbm %s3, %s2200
          %s2202 = sshll.u32 %s2192, 4
          %s2203 = int_to_ptr.vmem [resolvable:$true] %s2202
          %2208 = dma.vmem_to_hbm [thread:$0]  %s2203, 4096, %s2201, %s2189, 128, 128, 8
        $region44: #{tpu_custom_call.1} parent=31 // pred_fallthru
          _
      $region32: #{tpu_custom_call.1} parent=5 // pred_fallthru
        _
      %p2209 = scmp.le.s32.totalorder 2, %s16
      // Predicated region
      $region45: #{tpu_custom_call.1} parent=5 // pred_check
        %p2210 = pneg %p2209
      $region46: #{tpu_custom_call.1} parent=5 // pred_check_branch
        %2212 = sbr.rel (%p2210) target = $region48
      $region47: #{tpu_custom_call.1} parent=5 // pred_region
        %s2213 = ssub.s32 %s16, 2
        // Predicated region
        $region49: #{tpu_custom_call.1} parent=47 // pred_check
          %p2214 = pneg %p113
        $region50: #{tpu_custom_call.1} parent=47 // pred_check_branch
          %2216 = sbr.rel (%p2214) target = $region52
        $region51: #{tpu_custom_call.1} parent=47 // pred_region
          %s2217 = sand.u32 %s98, 1
          %s2218 = scalar_lea.sflag [#allocation4], %s2217
          %s2219 = sand.u32 %s98, 1
          %s2220 = smul.addr %s2219, 256
          %s2221 = scalar_lea.vmem [#allocation7], %s2220
          %2222 = dma.done %s2218, 4096
        $region52: #{tpu_custom_call.1} parent=47 // pred_fallthru
          _
      $region48: #{tpu_custom_call.1} parent=5 // pred_fallthru
        _
    $region6: #{tpu_custom_call.1} parent=1 // loop_footer
      %s20 = sadd.s32 1, %s16
    $region7: #{tpu_custom_call.1} parent=1 // loop_footer_branch
      %15 = sbr.rel target = $region3
    $region8: #{tpu_custom_call.1} parent=1 // loop_exit
      _
    %2223 = vsyncpa [#allocation3], 1
    %s2224 = scalar_lea.sflag [#allocation3], 1
    %2225 = vsyncpa %s2224, 1
    %2226 = vsyncpa [#allocation6], 1
    %2227 = vsyncpa [#allocation4], 1
    %s2228 = scalar_lea.sflag [#allocation4], 1
    %2229 = vsyncpa %s2228, 1

</llo_original>
